<compile_context>
chip_gen: v7x
topology: tpu7x:2x2x1
jax: 0.10.0
libtpu: 0.0.40
codegen_flags: <defaults>
</compile_context>

<pallas_src>
import jax
import jax.numpy as jnp
from jax import lax
from jax.experimental import pallas as pl
from jax.experimental.pallas import tpu as pltpu

D = 50
BN_EPS = 1e-5
HIDDEN_MULT = 4
#   BN(3) NL(3) JacLin(3->50) | [BN(50) NL(50) JacLin(50)] x3 | BN(50) NL(50) Linear(50->3)
BLOCKS = [(3, D), (D, D), (D, D), (D, D), (D, 3)]
NUM_STEPS = len(BLOCKS)

SLAB_LANES = 256   # [x1 / log_s / y1 half | x2 / t / y2 half] split at the 128-lane boundary
HALF = 128
PARAM_DTYPE = jnp.bfloat16   # bf16 weights: single-pass MXU (v6e/v7x), half the slab DMA (v5e)


def _block_dims(d):
    d1 = d // 2
    d2 = d - d1
    return d1, d2, HIDDEN_MULT * d


def _round8(r):
    return ((r + 7) // 8) * 8


def _next_split(bi):
    """How block bi's linear output columns split into the next block's (x1, x2)."""
    d_out = BLOCKS[bi][1]
    if bi + 1 < len(BLOCKS):
        o1, o2, _ = _block_dims(BLOCKS[bi + 1][0])
        return o1, o2
    return d_out, 0  # last block: raw (N, 3) output, all in the lower half


def _chunk_layout(d1, d2, h):
    """Row offsets of one block's parameters inside its fixed-size slab chunk.

    All one-row vectors share a single 8-row tile (rows 0..7); weights start at
    8-row-aligned offsets.  Column convention everywhere: "x1 / log_s / y1" data in
    lanes [0,128), "x2 / t / y2" data in lanes [128,256).
    """
    e = {
        'gamma': (0, 1, SLAB_LANES),
        'beta':  (1, 1, SLAB_LANES),
        'mask':  (2, 1, SLAB_LANES),
        'b1':    (3, 1, h),
        'b2':    (4, 1, SLAB_LANES),
        'lb':    (5, 1, SLAB_LANES),
    }
    row = 8
    e['w1'] = (row, d1, h);           row += _round8(d1)
    e['w2'] = (row, h, SLAB_LANES);   row += _round8(h)      # fused [log_s | t] weight
    e['lwA'] = (row, d1, SLAB_LANES); row += _round8(d1)     # fused [y1 | y2], rows from x1
    e['lwB'] = (row, d2, SLAB_LANES); row += _round8(d2)     # fused [y1 | y2], rows from x2
    return e, row


_D1_0, _D2_0, _H_0 = _block_dims(BLOCKS[0][0])   # (1, 2, 12)
_D1_U, _D2_U, _H_U = _block_dims(D)              # (25, 25, 200)
LAYOUT0, _ROWS0 = _chunk_layout(_D1_0, _D2_0, _H_0)
LAYOUTU, _ROWSU = _chunk_layout(_D1_U, _D2_U, _H_U)
ROWS_PER_STEP = _round8(max(_ROWS0, _ROWSU))     # 304
SLAB_ROWS = NUM_STEPS * ROWS_PER_STEP            # 1520
KU = _round8(_D1_U)                              # 32: 8-rounded contraction width (pad rows are 0)


# --------------------------------------------------------------------------------------
# Kernel: one INN block (BN -> RealNVP coupling -> (Jacobian)Linear) per grid step
# --------------------------------------------------------------------------------------
def inn_kernel(x_ref, slab_ref, y0_ref, yt_ref, ld_ref, xc_ref, ld_acc_ref):
    step = pl.program_id(0)
    n = x_ref.shape[0]
    inv_n = jnp.float32(1.0 / n)
    f32 = jnp.float32
    wdt = slab_ref.dtype  # bf16

    def row(layout, name):
        r0 = layout[name][0]
        return slab_ref[r0:r0 + 1, :]

    def bn_stats(xp):
        # Two-pass mean / variance (safer than E[x^2] - mean^2 in f32).
        mean = jnp.sum(xp, axis=0, keepdims=True) * inv_n
        xm = xp - mean
        var = jnp.sum(xm * xm, axis=0, keepdims=True) * inv_n
        return xm, lax.rsqrt(var + BN_EPS)

    # ------------------- step 0: the 3-wide first block (narrow path) -------------------
    @pl.when(step == 0)
    def _():
        L = LAYOUT0
        d1, d2, h = _D1_0, _D2_0, _H_0
        x = x_ref[...].astype(f32)                       # (N, 3)
        x1, x2 = x[:, :d1], x[:, d1:]

        # INN.BatchNorm1d (training mode -> batch statistics, in-kernel)
        grow = row(L, 'gamma').astype(f32)
        brow = row(L, 'beta').astype(f32)
        g1, g2 = grow[:, :d1], grow[:, HALF:HALF + d2]
        bt1, bt2 = brow[:, :d1], brow[:, HALF:HALF + d2]
        xm1, is1 = bn_stats(x1)
        xm2, is2 = bn_stats(x2)
        x1 = xm1 * (is1 * g1) + bt1
        x2 = xm2 * (is2 * g2) + bt2
        ld_bn = (jnp.sum(jnp.log(jnp.abs(g1) * is1), axis=-1, keepdims=True)
                 + jnp.sum(jnp.log(jnp.abs(g2) * is2), axis=-1, keepdims=True))   # (1,1)

        # INN.Nonlinear(3, 'RealNVP'): x1 (width 1) conditions x2.
        # TODO(synk): INNLab's exact sub-network (width / activation / log-scale clamp)
        # is approximated by a 2-layer ReLU MLP; log_s is left unclamped.
        w1 = slab_ref[L['w1'][0]:L['w1'][0] + d1, :h].astype(f32)                 # (1, 12)
        b1 = row(L, 'b1')[:, :h].astype(f32)
        hid = jnp.maximum(x1 * w1 + b1, 0.0)              # VPU broadcast, not a K=1 MXU matmul
        w2 = slab_ref[L['w2'][0]:L['w2'][0] + h, :].astype(f32)                   # (12, 256)
        b2 = row(L, 'b2').astype(f32)
        st = jnp.dot(hid, w2, preferred_element_type=f32) + b2                    # (N, 256)
        log_s = st[:, :d2]
        t = st[:, HALF:HALF + d2]
        x2 = x2 * jnp.exp(log_s) + t
        ld_dyn = jnp.sum(log_s, axis=-1, keepdims=True)                           # (N, 1)

        # INN.JacobianLinear(3 -> 50): output produced directly in the next block's
        # (y1 | y2) lane halves; tiny contractions (K=1, K=2) stay on the VPU.
        lwA = slab_ref[L['lwA'][0]:L['lwA'][0] + d1, :].astype(f32)               # (1, 256)
        lwB = slab_ref[L['lwB'][0]:L['lwB'][0] + d2, :].astype(f32)               # (2, 256)
        lb = row(L, 'lb').astype(f32)
        y = x1 * lwA + lb
        for j in range(d2):
            y = y + x2[:, j:j + 1] * lwB[j:j + 1, :]                              # (N, 256)

        xc_ref[...] = y
        ld_acc_ref[...] = ld_dyn + ld_bn

    # ------------- steps 1..4: 50-wide blocks on the combined (N, 256) layout -------------
    @pl.when(step > 0)
    def _():
        L = LAYOUTU
        h = _H_U
        xc = xc_ref[...]                                  # (N, 256) f32

        # BatchNorm over the combined tensor: pad lanes carry gamma=1 / beta=0 / mask=0,
        # so they stay exactly 0 and the (finite) log term is masked out of the logdet.
        gamma = row(L, 'gamma').astype(f32)
        beta = row(L, 'beta').astype(f32)
        mask = row(L, 'mask').astype(f32)
        xm, inv_std = bn_stats(xc)
        xn = xm * (inv_std * gamma) + beta
        ld_bn = jnp.sum(jnp.log(jnp.abs(gamma) * inv_std) * mask,
                        axis=-1, keepdims=True)           # (1, 1)

        x1h, x2h = xn[:, :HALF], xn[:, HALF:]

        # RealNVP coupling: one fused (h, 256) matmul yields [log_s | t] split at lane 128.
        w1 = slab_ref[L['w1'][0]:L['w1'][0] + KU, :h]      # (32, 200) bf16, pad rows zero
        b1 = row(L, 'b1')[:, :h].astype(f32)
        hid = jnp.maximum(
            jnp.dot(x1h[:, :KU].astype(wdt), w1, preferred_element_type=f32) + b1, 0.0)
        w2 = slab_ref[L['w2'][0]:L['w2'][0] + h, :]        # (200, 256) bf16
        b2 = row(L, 'b2').astype(f32)
        st = jnp.dot(hid.astype(wdt), w2, preferred_element_type=f32) + b2        # (N, 256)
        log_s, t = st[:, :HALF], st[:, HALF:]              # f32; padding lanes are exactly 0
        x2h = x2h * jnp.exp(log_s) + t
        ld_dyn = jnp.sum(log_s, axis=-1, keepdims=True)    # (N, 1)

        # (Jacobian)Linear: two fused (32, 256) matmuls produce the next block's
        # (y1 | y2) halves directly at the 128-lane boundary (2 matmuls instead of 4).
        lwA = slab_ref[L['lwA'][0]:L['lwA'][0] + KU, :]    # (32, 256) bf16
        lwB = slab_ref[L['lwB'][0]:L['lwB'][0] + KU, :]    # (32, 256) bf16
        lb = row(L, 'lb').astype(f32)
        y = (jnp.dot(x1h[:, :KU].astype(wdt), lwA, preferred_element_type=f32)
             + jnp.dot(x2h[:, :KU].astype(wdt), lwB, preferred_element_type=f32)
             + lb)                                         # (N, 256)

        xc_ref[...] = y
        ld_acc_ref[...] = ld_acc_ref[...] + ld_dyn + ld_bn

    # ---------------- finalize: lane-dense stores, written once on the last step ----------------
    @pl.when(step == pl.num_programs(0) - 1)
    def _():
        yh = xc_ref[:, :HALF]                              # raw output lives in lanes [0, 3)
        y0_ref[...] = yh
        yt_ref[...] = jnp.tanh(yh)
        ld_ref[...] = ld_acc_ref[...]


# --------------------------------------------------------------------------------------
# Host-side parameter construction & packing
# --------------------------------------------------------------------------------------
def init_params(key):
    """Deterministic synthetic parameters (not a checkpoint load)."""
    blocks = []
    for (d, d_out) in BLOCKS:
        d1, d2, h = _block_dims(d)
        key, k1, k2, k3 = jax.random.split(key, 4)
        blocks.append(dict(
            gamma=jnp.ones((1, d), jnp.float32),           # torch BatchNorm1d defaults
            beta=jnp.zeros((1, d), jnp.float32),
            w1=jax.random.normal(k1, (d1, h), jnp.float32) / jnp.sqrt(float(d1)),
            b1=jnp.zeros((1, h), jnp.float32),
            w2=0.05 * jax.random.normal(k2, (h, 2 * d2), jnp.float32) / jnp.sqrt(float(h)),
            b2=jnp.zeros((1, 2 * d2), jnp.float32),
            lw=jax.random.normal(k3, (d, d_out), jnp.float32) / jnp.sqrt(float(d)),
            lb=jnp.zeros((1, d_out), jnp.float32),
        ))
    return blocks


def quantize_params(blocks):
    """Round every parameter to bf16 (the slab storage dtype) so the kernel and the
    pure-JAX reference consume identical parameter values."""
    return [{k: v.astype(jnp.bfloat16).astype(jnp.float32) for k, v in b.items()}
            for b in blocks]


def linear_const_logdet(blocks):
    # TODO(synk): INN.Linear / non-square JacobianLinear logdet convention is
    # approximated as 0.5*log|det(J J^T)| (data-independent -> added in the wrapper).
    c = jnp.zeros((), jnp.float32)
    for p, (d, d_out) in zip(blocks, BLOCKS):
        lw = p['lw']
        if d == d_out:
            c = c + jnp.linalg.slogdet(lw)[1]
        elif d_out > d:
            c = c + 0.5 * jnp.linalg.slogdet(lw @ lw.T)[1]
        else:
            c = c + 0.5 * jnp.linalg.slogdet(lw.T @ lw)[1]
    return c


def pack_params(blocks):
    """Split (at the 128-lane boundary) and pack every parameter into one bf16
    (SLAB_ROWS, 256) slab: one fixed-size chunk per block, so the chunk of block i+1
    is prefetched while block i computes."""
    slab = jnp.zeros((SLAB_ROWS, SLAB_LANES), jnp.float32)

    def put(s, r, c, arr):
        return s.at[r:r + arr.shape[0], c:c + arr.shape[1]].set(arr.astype(jnp.float32))

    for bi, (d, _d_out) in enumerate(BLOCKS):
        d1, d2, _h = _block_dims(d)
        o1, o2 = _next_split(bi)
        L = LAYOUT0 if bi == 0 else LAYOUTU
        base = bi * ROWS_PER_STEP
        p = blocks[bi]

        grow = jnp.ones((1, SLAB_LANES), jnp.float32)      # pad gamma = 1 keeps log() finite
        grow = grow.at[:, :d1].set(p['gamma'][:, :d1]).at[:, HALF:HALF + d2].set(p['gamma'][:, d1:])
        brow = jnp.zeros((1, SLAB_LANES), jnp.float32)
        brow = brow.at[:, :d1].set(p['beta'][:, :d1]).at[:, HALF:HALF + d2].set(p['beta'][:, d1:])
        mrow = jnp.zeros((1, SLAB_LANES), jnp.float32)
        mrow = mrow.at[:, :d1].set(1.0).at[:, HALF:HALF + d2].set(1.0)
        b2row = jnp.zeros((1, SLAB_LANES), jnp.float32)
        b2row = b2row.at[:, :d2].set(p['b2'][:, :d2]).at[:, HALF:HALF + d2].set(p['b2'][:, d2:])
        lbrow = jnp.zeros((1, SLAB_LANES), jnp.float32)
        lbrow = lbrow.at[:, :o1].set(p['lb'][:, :o1])
        if o2 > 0:
            lbrow = lbrow.at[:, HALF:HALF + o2].set(p['lb'][:, o1:])

        slab = put(slab, base + L['gamma'][0], 0, grow)
        slab = put(slab, base + L['beta'][0], 0, brow)
        slab = put(slab, base + L['mask'][0], 0, mrow)
        slab = put(slab, base + L['b1'][0], 0, p['b1'])
        slab = put(slab, base + L['b2'][0], 0, b2row)
        slab = put(slab, base + L['lb'][0], 0, lbrow)

        slab = put(slab, base + L['w1'][0], 0, p['w1'])
        slab = put(slab, base + L['w2'][0], 0, p['w2'][:, :d2])        # log_s columns
        slab = put(slab, base + L['w2'][0], HALF, p['w2'][:, d2:])     # t columns
        slab = put(slab, base + L['lwA'][0], 0, p['lw'][:d1, :o1])     # y1 columns, x1 rows
        slab = put(slab, base + L['lwB'][0], 0, p['lw'][d1:, :o1])     # y1 columns, x2 rows
        if o2 > 0:
            slab = put(slab, base + L['lwA'][0], HALF, p['lw'][:d1, o1:])
            slab = put(slab, base + L['lwB'][0], HALF, p['lw'][d1:, o1:])
    return slab.astype(PARAM_DTYPE)


# --------------------------------------------------------------------------------------
# Wrapper
# --------------------------------------------------------------------------------------
def inn_forward(sphere, slab, const_logdet):
    n = sphere.shape[0]
    y0, yt, ld = pl.pallas_call(
        inn_kernel,
        grid=(NUM_STEPS,),
        in_specs=[
            pl.BlockSpec((n, 3), lambda i: (0, 0)),
            pl.BlockSpec((ROWS_PER_STEP, SLAB_LANES), lambda i: (i, 0)),
        ],
        out_specs=(
            pl.BlockSpec((n, HALF), lambda i: (0, 0)),
            pl.BlockSpec((n, HALF), lambda i: (0, 0)),
            pl.BlockSpec((n, 1), lambda i: (0, 0)),
        ),
        out_shape=(
            jax.ShapeDtypeStruct((n, HALF), jnp.float32),
            jax.ShapeDtypeStruct((n, HALF), jnp.float32),
            jax.ShapeDtypeStruct((n, 1), jnp.float32),
        ),
        scratch_shapes=[
            pltpu.VMEM((n, SLAB_LANES), jnp.float32),   # carried (x1 | x2) activation
            pltpu.VMEM((n, 1), jnp.float32),            # carried per-sample logdet
        ],
        compiler_params=pltpu.CompilerParams(dimension_semantics=("arbitrary",)),
    )(sphere, slab)

    vertsparam0 = y0[:, :3]
    vertsparam = yt[:, :3]
    # data-independent linear-layer logdet constant added exactly (f32) in the wrapper
    logdet = ld[:, 0] + const_logdet
    logp = jnp.zeros((n,), jnp.float32)   # no dimension-dropping / prior layer -> logp = 0
    extras = dict(logp=logp, logdet=logdet, vertsparam0=vertsparam0)
    return vertsparam, extras


# --------------------------------------------------------------------------------------
# Pure-JAX reference (original unsplit math, f32) for a correctness cross-check
# --------------------------------------------------------------------------------------
def inn_reference(sphere, blocks, const_logdet):
    x = sphere
    n = x.shape[0]
    logdet = jnp.zeros((n,), jnp.float32) + const_logdet
    for p, (d, _d_out) in zip(blocks, BLOCKS):
        d1, d2, _h = _block_dims(d)
        mean = jnp.mean(x, axis=0, keepdims=True)
        var = jnp.mean((x - mean) ** 2, axis=0, keepdims=True)
        inv_std = lax.rsqrt(var + BN_EPS)
        x = (x - mean) * inv_std * p['gamma'] + p['beta']
        logdet = logdet + jnp.sum(jnp.log(jnp.abs(p['gamma']) * inv_std))
        x1, x2 = x[:, :d1], x[:, d1:]
        hid = jnp.maximum(
            jnp.dot(x1, p['w1'], precision=lax.Precision.HIGHEST) + p['b1'], 0.0)
        st = jnp.dot(hid, p['w2'], precision=lax.Precision.HIGHEST) + p['b2']
        log_s, t = st[:, :d2], st[:, d2:]
        x = jnp.concatenate([x1, x2 * jnp.exp(log_s) + t], axis=-1)
        logdet = logdet + jnp.sum(log_s, axis=-1)
        x = jnp.dot(x, p['lw'], precision=lax.Precision.HIGHEST) + p['lb']
    return x, logdet


if __name__ == "__main__":
    key = jax.random.PRNGKey(0)
    k_x, k_p = jax.random.split(key)

    N = 16
    sphere = jax.random.normal(k_x, (N, 3), jnp.float32)
    sphere = sphere / jnp.linalg.norm(sphere, axis=-1, keepdims=True)  # points on S^2

    blocks = quantize_params(init_params(k_p))   # bf16-rounded params (what the slab stores)
    const_logdet = linear_const_logdet(blocks)
    slab = pack_params(blocks)

    vertsparam, extras = jax.jit(inn_forward)(sphere, slab, const_logdet)
    jax.block_until_ready(vertsparam)
    jax.block_until_ready(extras["logdet"])

    assert vertsparam.shape == (N, 3)
    assert extras["vertsparam0"].shape == (N, 3)
    assert extras["logp"].shape == (N,)
    assert extras["logdet"].shape == (N,)
    assert bool(jnp.all(jnp.isfinite(vertsparam)))
    assert bool(jnp.all(jnp.isfinite(extras["logdet"])))
    assert bool(jnp.all(jnp.abs(vertsparam) <= 1.0))  # tanh range

    # Cross-check against the pure-JAX f32 reference (kernel feeds bf16 matmul operands,
    # so tolerances are modestly looser than the all-f32 version).
    v0_ref, logdet_ref = inn_reference(sphere, blocks, const_logdet)
    assert bool(jnp.allclose(extras["vertsparam0"], v0_ref, rtol=5e-2, atol=5e-2))
    assert bool(jnp.allclose(vertsparam, jnp.tanh(v0_ref), rtol=5e-2, atol=5e-2))
    assert bool(jnp.allclose(extras["logdet"], logdet_ref, rtol=5e-2, atol=3e-1))

    print("KERNEL_OK")
</pallas_src>

<mosaic_0001>
module attributes {stable_mosaic.version = 11 : i64} {
  func.func @inn_kernel(%arg0: i32, %arg1: memref<16x3xf32, #tpu.memory_space<vmem>>, %arg2: memref<304x256xbf16, #tpu.memory_space<vmem>>, %arg3: memref<16x128xf32, #tpu.memory_space<vmem>>, %arg4: memref<16x128xf32, #tpu.memory_space<vmem>>, %arg5: memref<16x1xf32, #tpu.memory_space<vmem>>, %arg6: memref<16x256xf32, #tpu.memory_space<vmem>>, %arg7: memref<16x1xf32, #tpu.memory_space<vmem>>) attributes {dimension_semantics = [#tpu.dimension_semantics<arbitrary>], iteration_bounds = array<i64: 5>, scalar_prefetch = 0 : i64, scratch_operands = 2 : i64, tpu.core_type = #tpu.core_type<tc>, window_params = [{pipeline_mode = #tpu.pipeline_mode<synchronous>, transform_indices = @transform_0, window_bounds = array<i64: 16, 3>}, {transform_indices = @transform_1, window_bounds = array<i64: 304, 256>}, {pipeline_mode = #tpu.pipeline_mode<synchronous>, transform_indices = @transform_2, window_bounds = array<i64: 16, 128>}, {pipeline_mode = #tpu.pipeline_mode<synchronous>, transform_indices = @transform_3, window_bounds = array<i64: 16, 128>}, {pipeline_mode = #tpu.pipeline_mode<synchronous>, transform_indices = @transform_4, window_bounds = array<i64: 16, 1>}]} {
    %c0_i32 = arith.constant 0 : i32
    %0 = arith.cmpi eq, %arg0, %c0_i32 : i32
    %1 = arith.extui %0 : i1 to i32
    %cst = arith.constant 6.250000e-02 : f32
    %c0_i32_0 = arith.constant 0 : i32
    %2 = arith.cmpi ne, %1, %c0_i32_0 : i32
    scf.if %2 {
      %c0 = arith.constant 0 : index
      %c0_5 = arith.constant 0 : index
      %9 = vector.load %arg1[%c0, %c0_5] : memref<16x3xf32, #tpu.memory_space<vmem>>, vector<16x3xf32>
      %10 = vector.extract_strided_slice %9 {offsets = [0, 0], sizes = [16, 1], strides = [1, 1]} : vector<16x3xf32> to vector<16x1xf32>
      %11 = vector.extract_strided_slice %9 {offsets = [0, 1], sizes = [16, 2], strides = [1, 1]} : vector<16x3xf32> to vector<16x2xf32>
      %c0_6 = arith.constant 0 : index
      %c0_7 = arith.constant 0 : index
      %12 = vector.load %arg2[%c0_6, %c0_7] : memref<304x256xbf16, #tpu.memory_space<vmem>>, vector<1x256xbf16>
      %13 = arith.extf %12 : vector<1x256xbf16> to vector<1x256xf32>
      %c1 = arith.constant 1 : index
      %c0_8 = arith.constant 0 : index
      %14 = vector.load %arg2[%c1, %c0_8] : memref<304x256xbf16, #tpu.memory_space<vmem>>, vector<1x256xbf16>
      %15 = arith.extf %14 : vector<1x256xbf16> to vector<1x256xf32>
      %16 = vector.extract_strided_slice %13 {offsets = [0, 0], sizes = [1, 1], strides = [1, 1]} : vector<1x256xf32> to vector<1x1xf32>
      %17 = vector.extract_strided_slice %13 {offsets = [0, 128], sizes = [1, 2], strides = [1, 1]} : vector<1x256xf32> to vector<1x2xf32>
      %18 = vector.extract_strided_slice %15 {offsets = [0, 0], sizes = [1, 1], strides = [1, 1]} : vector<1x256xf32> to vector<1x1xf32>
      %19 = vector.extract_strided_slice %15 {offsets = [0, 128], sizes = [1, 2], strides = [1, 1]} : vector<1x256xf32> to vector<1x2xf32>
      %cst_9 = arith.constant dense<0.000000e+00> : vector<1xf32>
      %20 = vector.multi_reduction <add>, %10, %cst_9 [0] : vector<16x1xf32> to vector<1xf32>
      %21 = vector.shape_cast %20 : vector<1xf32> to vector<1x1xf32>
      %22 = vector.broadcast %cst : f32 to vector<1x1xf32>
      %23 = arith.mulf %21, %22 : vector<1x1xf32>
      %24 = vector.broadcast %23 : vector<1x1xf32> to vector<16x1xf32>
      %25 = arith.subf %10, %24 : vector<16x1xf32>
      %26 = arith.mulf %25, %25 : vector<16x1xf32>
      %cst_10 = arith.constant dense<0.000000e+00> : vector<1xf32>
      %27 = vector.multi_reduction <add>, %26, %cst_10 [0] : vector<16x1xf32> to vector<1xf32>
      %28 = vector.shape_cast %27 : vector<1xf32> to vector<1x1xf32>
      %29 = vector.broadcast %cst : f32 to vector<1x1xf32>
      %30 = arith.mulf %28, %29 : vector<1x1xf32>
      %cst_11 = arith.constant 9.99999974E-6 : f32
      %31 = vector.broadcast %cst_11 : f32 to vector<1x1xf32>
      %32 = arith.addf %30, %31 : vector<1x1xf32>
      %33 = math.rsqrt %32 : vector<1x1xf32>
      %cst_12 = arith.constant dense<0.000000e+00> : vector<2xf32>
      %34 = vector.multi_reduction <add>, %11, %cst_12 [0] : vector<16x2xf32> to vector<2xf32>
      %35 = vector.shape_cast %34 : vector<2xf32> to vector<1x2xf32>
      %36 = vector.broadcast %cst : f32 to vector<1x2xf32>
      %37 = arith.mulf %35, %36 : vector<1x2xf32>
      %38 = vector.broadcast %37 : vector<1x2xf32> to vector<16x2xf32>
      %39 = arith.subf %11, %38 : vector<16x2xf32>
      %40 = arith.mulf %39, %39 : vector<16x2xf32>
      %cst_13 = arith.constant dense<0.000000e+00> : vector<2xf32>
      %41 = vector.multi_reduction <add>, %40, %cst_13 [0] : vector<16x2xf32> to vector<2xf32>
      %42 = vector.shape_cast %41 : vector<2xf32> to vector<1x2xf32>
      %43 = vector.broadcast %cst : f32 to vector<1x2xf32>
      %44 = arith.mulf %42, %43 : vector<1x2xf32>
      %cst_14 = arith.constant 9.99999974E-6 : f32
      %45 = vector.broadcast %cst_14 : f32 to vector<1x2xf32>
      %46 = arith.addf %44, %45 : vector<1x2xf32>
      %47 = math.rsqrt %46 : vector<1x2xf32>
      %48 = arith.mulf %33, %16 : vector<1x1xf32>
      %49 = vector.broadcast %48 : vector<1x1xf32> to vector<16x1xf32>
      %50 = arith.mulf %25, %49 : vector<16x1xf32>
      %51 = vector.broadcast %18 : vector<1x1xf32> to vector<16x1xf32>
      %52 = arith.addf %50, %51 : vector<16x1xf32>
      %53 = arith.mulf %47, %17 : vector<1x2xf32>
      %54 = vector.broadcast %53 : vector<1x2xf32> to vector<16x2xf32>
      %55 = arith.mulf %39, %54 : vector<16x2xf32>
      %56 = vector.broadcast %19 : vector<1x2xf32> to vector<16x2xf32>
      %57 = arith.addf %55, %56 : vector<16x2xf32>
      %58 = math.absf %16 : vector<1x1xf32>
      %59 = arith.mulf %58, %33 : vector<1x1xf32>
      %60 = math.log %59 : vector<1x1xf32>
      %cst_15 = arith.constant dense<0.000000e+00> : vector<1xf32>
      %61 = vector.multi_reduction <add>, %60, %cst_15 [1] : vector<1x1xf32> to vector<1xf32>
      %62 = vector.shape_cast %61 : vector<1xf32> to vector<1x1xf32>
      %63 = math.absf %17 : vector<1x2xf32>
      %64 = arith.mulf %63, %47 : vector<1x2xf32>
      %65 = math.log %64 : vector<1x2xf32>
      %cst_16 = arith.constant dense<0.000000e+00> : vector<1xf32>
      %66 = vector.multi_reduction <add>, %65, %cst_16 [1] : vector<1x2xf32> to vector<1xf32>
      %67 = vector.shape_cast %66 : vector<1xf32> to vector<1x1xf32>
      %68 = arith.addf %62, %67 : vector<1x1xf32>
      %c8 = arith.constant 8 : index
      %c0_17 = arith.constant 0 : index
      %69 = vector.load %arg2[%c8, %c0_17] : memref<304x256xbf16, #tpu.memory_space<vmem>>, vector<1x12xbf16>
      %70 = arith.extf %69 : vector<1x12xbf16> to vector<1x12xf32>
      %c3 = arith.constant 3 : index
      %c0_18 = arith.constant 0 : index
      %71 = vector.load %arg2[%c3, %c0_18] : memref<304x256xbf16, #tpu.memory_space<vmem>>, vector<1x256xbf16>
      %72 = vector.extract_strided_slice %71 {offsets = [0, 0], sizes = [1, 12], strides = [1, 1]} : vector<1x256xbf16> to vector<1x12xbf16>
      %73 = arith.extf %72 : vector<1x12xbf16> to vector<1x12xf32>
      %74 = vector.broadcast %52 : vector<16x1xf32> to vector<16x12xf32>
      %75 = vector.broadcast %70 : vector<1x12xf32> to vector<16x12xf32>
      %76 = arith.mulf %74, %75 : vector<16x12xf32>
      %77 = vector.broadcast %73 : vector<1x12xf32> to vector<16x12xf32>
      %78 = arith.addf %76, %77 : vector<16x12xf32>
      %cst_19 = arith.constant 0.000000e+00 : f32
      %79 = vector.broadcast %cst_19 : f32 to vector<16x12xf32>
      %80 = arith.maximumf %78, %79 : vector<16x12xf32>
      %c16 = arith.constant 16 : index
      %c0_20 = arith.constant 0 : index
      %81 = vector.load %arg2[%c16, %c0_20] : memref<304x256xbf16, #tpu.memory_space<vmem>>, vector<12x256xbf16>
      %82 = arith.extf %81 : vector<12x256xbf16> to vector<12x256xf32>
      %c4 = arith.constant 4 : index
      %c0_21 = arith.constant 0 : index
      %83 = vector.load %arg2[%c4, %c0_21] : memref<304x256xbf16, #tpu.memory_space<vmem>>, vector<1x256xbf16>
      %84 = arith.extf %83 : vector<1x256xbf16> to vector<1x256xf32>
      %cst_22 = arith.constant dense<0.000000e+00> : vector<16x256xf32>
      %85 = tpu.matmul %80, %82, %cst_22 {dimension_numbers = #tpu.dot_dimension_numbers<[1], [0], [0], [1], [0, 0, 1, 1], [], []>} : vector<16x12xf32>, vector<12x256xf32>, vector<16x256xf32> -> vector<16x256xf32>
      %86 = vector.broadcast %84 : vector<1x256xf32> to vector<16x256xf32>
      %87 = arith.addf %85, %86 : vector<16x256xf32>
      %88 = vector.extract_strided_slice %87 {offsets = [0, 0], sizes = [16, 2], strides = [1, 1]} : vector<16x256xf32> to vector<16x2xf32>
      %89 = vector.extract_strided_slice %87 {offsets = [0, 128], sizes = [16, 2], strides = [1, 1]} : vector<16x256xf32> to vector<16x2xf32>
      %90 = math.exp %88 : vector<16x2xf32>
      %91 = arith.mulf %57, %90 : vector<16x2xf32>
      %92 = arith.addf %91, %89 : vector<16x2xf32>
      %cst_23 = arith.constant dense<0.000000e+00> : vector<16xf32>
      %93 = vector.multi_reduction <add>, %88, %cst_23 [1] : vector<16x2xf32> to vector<16xf32>
      %94 = vector.shape_cast %93 : vector<16xf32> to vector<16x1xf32>
      %c32 = arith.constant 32 : index
      %c0_24 = arith.constant 0 : index
      %95 = vector.load %arg2[%c32, %c0_24] : memref<304x256xbf16, #tpu.memory_space<vmem>>, vector<1x256xbf16>
      %96 = arith.extf %95 : vector<1x256xbf16> to vector<1x256xf32>
      %c40 = arith.constant 40 : index
      %c0_25 = arith.constant 0 : index
      %97 = vector.load %arg2[%c40, %c0_25] : memref<304x256xbf16, #tpu.memory_space<vmem>>, vector<2x256xbf16>
      %98 = arith.extf %97 : vector<2x256xbf16> to vector<2x256xf32>
      %c5 = arith.constant 5 : index
      %c0_26 = arith.constant 0 : index
      %99 = vector.load %arg2[%c5, %c0_26] : memref<304x256xbf16, #tpu.memory_space<vmem>>, vector<1x256xbf16>
      %100 = arith.extf %99 : vector<1x256xbf16> to vector<1x256xf32>
      %101 = vector.broadcast %52 : vector<16x1xf32> to vector<16x256xf32>
      %102 = vector.broadcast %96 : vector<1x256xf32> to vector<16x256xf32>
      %103 = arith.mulf %101, %102 : vector<16x256xf32>
      %104 = vector.broadcast %100 : vector<1x256xf32> to vector<16x256xf32>
      %105 = arith.addf %103, %104 : vector<16x256xf32>
      %106 = vector.extract_strided_slice %92 {offsets = [0, 0], sizes = [16, 1], strides = [1, 1]} : vector<16x2xf32> to vector<16x1xf32>
      %107 = vector.extract_strided_slice %98 {offsets = [0, 0], sizes = [1, 256], strides = [1, 1]} : vector<2x256xf32> to vector<1x256xf32>
      %108 = vector.broadcast %106 : vector<16x1xf32> to vector<16x256xf32>
      %109 = vector.broadcast %107 : vector<1x256xf32> to vector<16x256xf32>
      %110 = arith.mulf %108, %109 : vector<16x256xf32>
      %111 = arith.addf %105, %110 : vector<16x256xf32>
      %112 = vector.extract_strided_slice %92 {offsets = [0, 1], sizes = [16, 1], strides = [1, 1]} : vector<16x2xf32> to vector<16x1xf32>
      %113 = vector.extract_strided_slice %98 {offsets = [1, 0], sizes = [1, 256], strides = [1, 1]} : vector<2x256xf32> to vector<1x256xf32>
      %114 = vector.broadcast %112 : vector<16x1xf32> to vector<16x256xf32>
      %115 = vector.broadcast %113 : vector<1x256xf32> to vector<16x256xf32>
      %116 = arith.mulf %114, %115 : vector<16x256xf32>
      %117 = arith.addf %111, %116 : vector<16x256xf32>
      %c0_27 = arith.constant 0 : index
      %c0_28 = arith.constant 0 : index
      %118 = vector.load %arg6[%c0_27, %c0_28] : memref<16x256xf32, #tpu.memory_space<vmem>>, vector<16x256xf32>
      tpu.vector_store %arg6[%c0_27, %c0_28], %117 {strides = array<i32>} : memref<16x256xf32, #tpu.memory_space<vmem>>, vector<16x256xf32>,
      %119 = vector.broadcast %68 : vector<1x1xf32> to vector<16x1xf32>
      %120 = arith.addf %94, %119 : vector<16x1xf32>
      %c0_29 = arith.constant 0 : index
      %c0_30 = arith.constant 0 : index
      %121 = vector.load %arg7[%c0_29, %c0_30] : memref<16x1xf32, #tpu.memory_space<vmem>>, vector<16x1xf32>
      tpu.vector_store %arg7[%c0_29, %c0_30], %120 {strides = array<i32>} : memref<16x1xf32, #tpu.memory_space<vmem>>, vector<16x1xf32>,
    } else {
    }
    %c0_i32_1 = arith.constant 0 : i32
    %3 = arith.cmpi sgt, %arg0, %c0_i32_1 : i32
    %4 = arith.extui %3 : i1 to i32
    %cst_2 = arith.constant 6.250000e-02 : f32
    %c0_i32_3 = arith.constant 0 : i32
    %5 = arith.cmpi ne, %4, %c0_i32_3 : i32
    scf.if %5 {
      %c0 = arith.constant 0 : index
      %c0_5 = arith.constant 0 : index
      %9 = vector.load %arg6[%c0, %c0_5] : memref<16x256xf32, #tpu.memory_space<vmem>>, vector<16x256xf32>
      %c0_6 = arith.constant 0 : index
      %c0_7 = arith.constant 0 : index
      %10 = vector.load %arg2[%c0_6, %c0_7] : memref<304x256xbf16, #tpu.memory_space<vmem>>, vector<1x256xbf16>
      %11 = arith.extf %10 : vector<1x256xbf16> to vector<1x256xf32>
      %c1 = arith.constant 1 : index
      %c0_8 = arith.constant 0 : index
      %12 = vector.load %arg2[%c1, %c0_8] : memref<304x256xbf16, #tpu.memory_space<vmem>>, vector<1x256xbf16>
      %13 = arith.extf %12 : vector<1x256xbf16> to vector<1x256xf32>
      %c2 = arith.constant 2 : index
      %c0_9 = arith.constant 0 : index
      %14 = vector.load %arg2[%c2, %c0_9] : memref<304x256xbf16, #tpu.memory_space<vmem>>, vector<1x256xbf16>
      %15 = arith.extf %14 : vector<1x256xbf16> to vector<1x256xf32>
      %cst_10 = arith.constant dense<0.000000e+00> : vector<256xf32>
      %16 = vector.multi_reduction <add>, %9, %cst_10 [0] : vector<16x256xf32> to vector<256xf32>
      %17 = vector.shape_cast %16 : vector<256xf32> to vector<1x256xf32>
      %18 = vector.broadcast %cst_2 : f32 to vector<1x256xf32>
      %19 = arith.mulf %17, %18 : vector<1x256xf32>
      %20 = vector.broadcast %19 : vector<1x256xf32> to vector<16x256xf32>
      %21 = arith.subf %9, %20 : vector<16x256xf32>
      %22 = arith.mulf %21, %21 : vector<16x256xf32>
      %cst_11 = arith.constant dense<0.000000e+00> : vector<256xf32>
      %23 = vector.multi_reduction <add>, %22, %cst_11 [0] : vector<16x256xf32> to vector<256xf32>
      %24 = vector.shape_cast %23 : vector<256xf32> to vector<1x256xf32>
      %25 = vector.broadcast %cst_2 : f32 to vector<1x256xf32>
      %26 = arith.mulf %24, %25 : vector<1x256xf32>
      %cst_12 = arith.constant 9.99999974E-6 : f32
      %27 = vector.broadcast %cst_12 : f32 to vector<1x256xf32>
      %28 = arith.addf %26, %27 : vector<1x256xf32>
      %29 = math.rsqrt %28 : vector<1x256xf32>
      %30 = arith.mulf %29, %11 : vector<1x256xf32>
      %31 = vector.broadcast %30 : vector<1x256xf32> to vector<16x256xf32>
      %32 = arith.mulf %21, %31 : vector<16x256xf32>
      %33 = vector.broadcast %13 : vector<1x256xf32> to vector<16x256xf32>
      %34 = arith.addf %32, %33 : vector<16x256xf32>
      %35 = math.absf %11 : vector<1x256xf32>
      %36 = arith.mulf %35, %29 : vector<1x256xf32>
      %37 = math.log %36 : vector<1x256xf32>
      %38 = arith.mulf %37, %15 : vector<1x256xf32>
      %cst_13 = arith.constant dense<0.000000e+00> : vector<1xf32>
      %39 = vector.multi_reduction <add>, %38, %cst_13 [1] : vector<1x256xf32> to vector<1xf32>
      %40 = vector.shape_cast %39 : vector<1xf32> to vector<1x1xf32>
      %41 = vector.extract_strided_slice %34 {offsets = [0, 0], sizes = [16, 128], strides = [1, 1]} : vector<16x256xf32> to vector<16x128xf32>
      %42 = vector.extract_strided_slice %34 {offsets = [0, 128], sizes = [16, 128], strides = [1, 1]} : vector<16x256xf32> to vector<16x128xf32>
      %c8 = arith.constant 8 : index
      %c0_14 = arith.constant 0 : index
      %43 = vector.load %arg2[%c8, %c0_14] : memref<304x256xbf16, #tpu.memory_space<vmem>>, vector<32x200xbf16>
      %c3 = arith.constant 3 : index
      %c0_15 = arith.constant 0 : index
      %44 = vector.load %arg2[%c3, %c0_15] : memref<304x256xbf16, #tpu.memory_space<vmem>>, vector<1x256xbf16>
      %45 = vector.extract_strided_slice %44 {offsets = [0, 0], sizes = [1, 200], strides = [1, 1]} : vector<1x256xbf16> to vector<1x200xbf16>
      %46 = arith.extf %45 : vector<1x200xbf16> to vector<1x200xf32>
      %47 = vector.extract_strided_slice %41 {offsets = [0, 0], sizes = [16, 32], strides = [1, 1]} : vector<16x128xf32> to vector<16x32xf32>
      %48 = arith.truncf %47 : vector<16x32xf32> to vector<16x32xbf16>
      %cst_16 = arith.constant dense<0.000000e+00> : vector<16x200xf32>
      %49 = tpu.matmul %48, %43, %cst_16 {dimension_numbers = #tpu.dot_dimension_numbers<[1], [0], [0], [1], [0, 0, 1, 1], [], []>} : vector<16x32xbf16>, vector<32x200xbf16>, vector<16x200xf32> -> vector<16x200xf32>
      %50 = vector.broadcast %46 : vector<1x200xf32> to vector<16x200xf32>
      %51 = arith.addf %49, %50 : vector<16x200xf32>
      %cst_17 = arith.constant 0.000000e+00 : f32
      %52 = vector.broadcast %cst_17 : f32 to vector<16x200xf32>
      %53 = arith.maximumf %51, %52 : vector<16x200xf32>
      %c40 = arith.constant 40 : index
      %c0_18 = arith.constant 0 : index
      %54 = vector.load %arg2[%c40, %c0_18] : memref<304x256xbf16, #tpu.memory_space<vmem>>, vector<200x256xbf16>
      %c4 = arith.constant 4 : index
      %c0_19 = arith.constant 0 : index
      %55 = vector.load %arg2[%c4, %c0_19] : memref<304x256xbf16, #tpu.memory_space<vmem>>, vector<1x256xbf16>
      %56 = arith.extf %55 : vector<1x256xbf16> to vector<1x256xf32>
      %57 = arith.truncf %53 : vector<16x200xf32> to vector<16x200xbf16>
      %cst_20 = arith.constant dense<0.000000e+00> : vector<16x256xf32>
      %58 = tpu.matmul %57, %54, %cst_20 {dimension_numbers = #tpu.dot_dimension_numbers<[1], [0], [0], [1], [0, 0, 1, 1], [], []>} : vector<16x200xbf16>, vector<200x256xbf16>, vector<16x256xf32> -> vector<16x256xf32>
      %59 = vector.broadcast %56 : vector<1x256xf32> to vector<16x256xf32>
      %60 = arith.addf %58, %59 : vector<16x256xf32>
      %61 = vector.extract_strided_slice %60 {offsets = [0, 0], sizes = [16, 128], strides = [1, 1]} : vector<16x256xf32> to vector<16x128xf32>
      %62 = vector.extract_strided_slice %60 {offsets = [0, 128], sizes = [16, 128], strides = [1, 1]} : vector<16x256xf32> to vector<16x128xf32>
      %63 = math.exp %61 : vector<16x128xf32>
      %64 = arith.mulf %42, %63 : vector<16x128xf32>
      %65 = arith.addf %64, %62 : vector<16x128xf32>
      %cst_21 = arith.constant dense<0.000000e+00> : vector<16xf32>
      %66 = vector.multi_reduction <add>, %61, %cst_21 [1] : vector<16x128xf32> to vector<16xf32>
      %67 = vector.shape_cast %66 : vector<16xf32> to vector<16x1xf32>
      %c240 = arith.constant 240 : index
      %c0_22 = arith.constant 0 : index
      %68 = vector.load %arg2[%c240, %c0_22] : memref<304x256xbf16, #tpu.memory_space<vmem>>, vector<32x256xbf16>
      %c272 = arith.constant 272 : index
      %c0_23 = arith.constant 0 : index
      %69 = vector.load %arg2[%c272, %c0_23] : memref<304x256xbf16, #tpu.memory_space<vmem>>, vector<32x256xbf16>
      %c5 = arith.constant 5 : index
      %c0_24 = arith.constant 0 : index
      %70 = vector.load %arg2[%c5, %c0_24] : memref<304x256xbf16, #tpu.memory_space<vmem>>, vector<1x256xbf16>
      %71 = arith.extf %70 : vector<1x256xbf16> to vector<1x256xf32>
      %72 = vector.extract_strided_slice %41 {offsets = [0, 0], sizes = [16, 32], strides = [1, 1]} : vector<16x128xf32> to vector<16x32xf32>
      %73 = arith.truncf %72 : vector<16x32xf32> to vector<16x32xbf16>
      %cst_25 = arith.constant dense<0.000000e+00> : vector<16x256xf32>
      %74 = tpu.matmul %73, %68, %cst_25 {dimension_numbers = #tpu.dot_dimension_numbers<[1], [0], [0], [1], [0, 0, 1, 1], [], []>} : vector<16x32xbf16>, vector<32x256xbf16>, vector<16x256xf32> -> vector<16x256xf32>
      %75 = vector.extract_strided_slice %65 {offsets = [0, 0], sizes = [16, 32], strides = [1, 1]} : vector<16x128xf32> to vector<16x32xf32>
      %76 = arith.truncf %75 : vector<16x32xf32> to vector<16x32xbf16>
      %cst_26 = arith.constant dense<0.000000e+00> : vector<16x256xf32>
      %77 = tpu.matmul %76, %69, %cst_26 {dimension_numbers = #tpu.dot_dimension_numbers<[1], [0], [0], [1], [0, 0, 1, 1], [], []>} : vector<16x32xbf16>, vector<32x256xbf16>, vector<16x256xf32> -> vector<16x256xf32>
      %78 = arith.addf %74, %77 : vector<16x256xf32>
      %79 = vector.broadcast %71 : vector<1x256xf32> to vector<16x256xf32>
      %80 = arith.addf %78, %79 : vector<16x256xf32>
      %c0_27 = arith.constant 0 : index
      %c0_28 = arith.constant 0 : index
      %81 = vector.load %arg6[%c0_27, %c0_28] : memref<16x256xf32, #tpu.memory_space<vmem>>, vector<16x256xf32>
      tpu.vector_store %arg6[%c0_27, %c0_28], %80 {strides = array<i32>} : memref<16x256xf32, #tpu.memory_space<vmem>>, vector<16x256xf32>,
      %c0_29 = arith.constant 0 : index
      %c0_30 = arith.constant 0 : index
      %82 = vector.load %arg7[%c0_29, %c0_30] : memref<16x1xf32, #tpu.memory_space<vmem>>, vector<16x1xf32>
      %83 = arith.addf %82, %67 : vector<16x1xf32>
      %84 = vector.broadcast %40 : vector<1x1xf32> to vector<16x1xf32>
      %85 = arith.addf %83, %84 : vector<16x1xf32>
      %c0_31 = arith.constant 0 : index
      %c0_32 = arith.constant 0 : index
      %86 = vector.load %arg7[%c0_31, %c0_32] : memref<16x1xf32, #tpu.memory_space<vmem>>, vector<16x1xf32>
      tpu.vector_store %arg7[%c0_31, %c0_32], %85 {strides = array<i32>} : memref<16x1xf32, #tpu.memory_space<vmem>>, vector<16x1xf32>,
    } else {
    }
    %c4_i32 = arith.constant 4 : i32
    %6 = arith.cmpi eq, %arg0, %c4_i32 : i32
    %7 = arith.extui %6 : i1 to i32
    %c0_i32_4 = arith.constant 0 : i32
    %8 = arith.cmpi ne, %7, %c0_i32_4 : i32
    scf.if %8 {
      %c0 = arith.constant 0 : index
      %c0_5 = arith.constant 0 : index
      %9 = vector.load %arg6[%c0, %c0_5] : memref<16x256xf32, #tpu.memory_space<vmem>>, vector<16x128xf32>
      %c0_6 = arith.constant 0 : index
      %c0_7 = arith.constant 0 : index
      %10 = vector.load %arg3[%c0_6, %c0_7] : memref<16x128xf32, #tpu.memory_space<vmem>>, vector<16x128xf32>
      tpu.vector_store %arg3[%c0_6, %c0_7], %9 {strides = array<i32>} : memref<16x128xf32, #tpu.memory_space<vmem>>, vector<16x128xf32>,
      %11 = math.tanh %9 : vector<16x128xf32>
      %c0_8 = arith.constant 0 : index
      %c0_9 = arith.constant 0 : index
      %12 = vector.load %arg4[%c0_8, %c0_9] : memref<16x128xf32, #tpu.memory_space<vmem>>, vector<16x128xf32>
      tpu.vector_store %arg4[%c0_8, %c0_9], %11 {strides = array<i32>} : memref<16x128xf32, #tpu.memory_space<vmem>>, vector<16x128xf32>,
      %c0_10 = arith.constant 0 : index
      %c0_11 = arith.constant 0 : index
      %13 = vector.load %arg7[%c0_10, %c0_11] : memref<16x1xf32, #tpu.memory_space<vmem>>, vector<16x1xf32>
      %c0_12 = arith.constant 0 : index
      %c0_13 = arith.constant 0 : index
      %14 = vector.load %arg5[%c0_12, %c0_13] : memref<16x1xf32, #tpu.memory_space<vmem>>, vector<16x1xf32>
      tpu.vector_store %arg5[%c0_12, %c0_13], %13 {strides = array<i32>} : memref<16x1xf32, #tpu.memory_space<vmem>>, vector<16x1xf32>,
    } else {
    }
    return
  }
  func.func @transform_0(%arg0: i32) -> (i32, i32) {
    %c0_i32 = arith.constant 0 : i32
    %c0_i32_0 = arith.constant 0 : i32
    %c0_i32_1 = arith.constant 0 : i32
    return %c0_i32, %c0_i32_0 : i32, i32
  }
  func.func @transform_1(%arg0: i32) -> (i32, i32) {
    %c0_i32 = arith.constant 0 : i32
    %c0_i32_0 = arith.constant 0 : i32
    return %arg0, %c0_i32 : i32, i32
  }
  func.func @transform_2(%arg0: i32) -> (i32, i32) {
    %c0_i32 = arith.constant 0 : i32
    %c0_i32_0 = arith.constant 0 : i32
    %c0_i32_1 = arith.constant 0 : i32
    return %c0_i32, %c0_i32_0 : i32, i32
  }
  func.func @transform_3(%arg0: i32) -> (i32, i32) {
    %c0_i32 = arith.constant 0 : i32
    %c0_i32_0 = arith.constant 0 : i32
    %c0_i32_1 = arith.constant 0 : i32
    return %c0_i32, %c0_i32_0 : i32, i32
  }
  func.func @transform_4(%arg0: i32) -> (i32, i32) {
    %c0_i32 = arith.constant 0 : i32
    %c0_i32_0 = arith.constant 0 : i32
    %c0_i32_1 = arith.constant 0 : i32
    return %c0_i32, %c0_i32_0 : i32, i32
  }
}

</mosaic_0001>

<llo_original>
// kernel: inn_forward.1
$region0: #{inn_forward.1}
  #allocation0 [shape = 'u32[]', space=smem, size = 0x4, offset = 0x4, fixed_abs, tag = 'smem constant byte address 0x4 - core index']
  #allocation1 [shape = 'u32[144,128]{1,0:T(1,128)}', space=vmem, size = 0x12000, scoped, tag = 'internal scratch']
  #allocation2 [shape = 'f32[16,256]{1,0:T(8,128)}', space=vmem, size = 0x4000, scoped, tag = 'scratch operand']
  #allocation3 [shape = 'f32[16,1]{1,0:T(8,128)}', space=vmem, size = 0x2000, scoped, tag = 'scratch operand']
  %s0 = inlined_call_operand.vmem [shape: f32[16,3], index: 0, kind: input, shape index: {}]
  %s1 = inlined_call_operand.hbm [shape: bf16[1520,256], index: 1, kind: input, shape index: {}]
  %s2 = inlined_call_operand.vmem [shape: f32[16,128], index: 2, kind: output, shape index: {0}]
  %s3 = inlined_call_operand.vmem [shape: f32[16,128], index: 3, kind: output, shape index: {1}]
  %s4 = inlined_call_operand.vmem [shape: f32[16,1], index: 4, kind: output, shape index: {2}]
  %5 = xla_tuple %s2, %s3, %s4
  %s6 = sld [smem:[#allocation0]]
  $region73: #{inn_forward.1} parent=0
    _
  %s8 = ssub.s32 1, %s6
  %s9 = scalar_select 0, %s8, %s6
  $region1: #{inn_forward.1} parent=0
    #allocation4 [shape = 'u8[311296]{0}', space=vmem, size = 0x4c000, scoped, tag = 'input window, operand 1']
    #allocation5 [shape = 's32[2]{0}', space=sflag, size = 0x8, scoped, tag = 'scoped memory for inn_forward.1']
    %10 = vsyncpa [#allocation5], 0
    %s11 = scalar_lea.sflag [#allocation5], 1
    %12 = vsyncpa %s11, 0
    loop: start=0, step=1, limit=7
    $region2: #{inn_forward.1} parent=1 // loop_pre_header
      _
    $region3: #{inn_forward.1} parent=1 // loop_header
      %s14 = sphi 0, %s18
      %p15 = scmp.ge.s32.totalorder %s14, 7
      %s22 = sphi 0, %s22
      %s24 = sphi 0, %s22
      %s25 = sphi 0, %s24
      %s39 = sphi 0, %s25
      %s45 = sphi 0, %s47
      %s48 = sphi 0, %s45
      %s49 = sphi 0, %s48
      %s65 = sphi 0, %s49
      %s69 = sphi 0, %s69
      %s71 = sphi 0, %s69
      %s72 = sphi 0, %s71
      %s86 = sphi 0, %s72
      %s90 = sphi 0, %s90
      %s92 = sphi 0, %s90
      %s93 = sphi 0, %s92
      %s107 = sphi 0, %s93
      %s111 = sphi 0, %s111
      %s113 = sphi 0, %s111
      %s114 = sphi 0, %s113
      %s128 = sphi 0, %s114
    $region4: #{inn_forward.1} parent=1 // loop_header_branch
      %17 = sbr.rel (%p15) target = $region8
    $region5: #{inn_forward.1} parent=1 // loop_body
      %s19 = ssub.s32 %s14, 1
      %s20 = ssub.s32 %s14, 2
      %s21 = sadd.s32 %s14, 1
      %s23 = sadd.s32 %s22, 1
      %p26 = scmp.eq.s32.totalorder %s14, 4
      %p27 = scmp.ne.s32.totalorder %s22, %s24
      %p28 = scmp.eq.s32.totalorder %s14, 0
      %p29 = por %p27, %p28
      %p30 = scmp.ne.s32.totalorder %s22, %s24
      %p31 = scmp.eq.s32.totalorder %s19, 4
      %p32 = por %p30, %p31
      %p33 = scmp.ne.s32.totalorder %s24, %s25
      %p34 = scmp.eq.s32.totalorder %s19, 0
      %p35 = por %p33, %p34
      %p36 = scmp.ne.s32.totalorder %s24, %s25
      %p37 = scmp.eq.s32.totalorder %s20, 4
      %p38 = por %p36, %p37
      %p40 = scmp.ne.s32.totalorder %s25, %s39
      %p41 = scmp.eq.s32.totalorder %s20, 0
      %p42 = por %p40, %p41
      %s43 = ssub.s32 %s14, %s21
      %p44 = scmp.eq.s32.totalorder %s43, 0
      %s46 = sadd.s32 %s45, 1
      %s47 = scalar_select %p44, %s45, %s46
      %p50 = pneg %p44
      %p51 = scmp.eq.s32.totalorder %s14, 4
      %p52 = por %p50, %p51
      %p53 = scmp.ne.s32.totalorder %s45, %s48
      %p54 = scmp.eq.s32.totalorder %s14, 0
      %p55 = por %p53, %p54
      %p56 = scmp.ne.s32.totalorder %s45, %s48
      %p57 = scmp.eq.s32.totalorder %s19, 4
      %p58 = por %p56, %p57
      %p59 = scmp.ne.s32.totalorder %s48, %s49
      %p60 = scmp.eq.s32.totalorder %s19, 0
      %p61 = por %p59, %p60
      %p62 = scmp.ne.s32.totalorder %s48, %s49
      %p63 = scmp.eq.s32.totalorder %s20, 4
      %p64 = por %p62, %p63
      %p66 = scmp.ne.s32.totalorder %s49, %s65
      %p67 = scmp.eq.s32.totalorder %s20, 0
      %p68 = por %p66, %p67
      %s70 = sadd.s32 %s69, 1
      %p73 = scmp.eq.s32.totalorder %s14, 4
      %p74 = scmp.ne.s32.totalorder %s69, %s71
      %p75 = scmp.eq.s32.totalorder %s14, 0
      %p76 = por %p74, %p75
      %p77 = scmp.ne.s32.totalorder %s69, %s71
      %p78 = scmp.eq.s32.totalorder %s19, 4
      %p79 = por %p77, %p78
      %p80 = scmp.ne.s32.totalorder %s71, %s72
      %p81 = scmp.eq.s32.totalorder %s19, 0
      %p82 = por %p80, %p81
      %p83 = scmp.ne.s32.totalorder %s71, %s72
      %p84 = scmp.eq.s32.totalorder %s20, 4
      %p85 = por %p83, %p84
      %p87 = scmp.ne.s32.totalorder %s72, %s86
      %p88 = scmp.eq.s32.totalorder %s20, 0
      %p89 = por %p87, %p88
      %s91 = sadd.s32 %s90, 1
      %p94 = scmp.eq.s32.totalorder %s14, 4
      %p95 = scmp.ne.s32.totalorder %s90, %s92
      %p96 = scmp.eq.s32.totalorder %s14, 0
      %p97 = por %p95, %p96
      %p98 = scmp.ne.s32.totalorder %s90, %s92
      %p99 = scmp.eq.s32.totalorder %s19, 4
      %p100 = por %p98, %p99
      %p101 = scmp.ne.s32.totalorder %s92, %s93
      %p102 = scmp.eq.s32.totalorder %s19, 0
      %p103 = por %p101, %p102
      %p104 = scmp.ne.s32.totalorder %s92, %s93
      %p105 = scmp.eq.s32.totalorder %s20, 4
      %p106 = por %p104, %p105
      %p108 = scmp.ne.s32.totalorder %s93, %s107
      %p109 = scmp.eq.s32.totalorder %s20, 0
      %p110 = por %p108, %p109
      %s112 = sadd.s32 %s111, 1
      %p115 = scmp.eq.s32.totalorder %s14, 4
      %p116 = scmp.ne.s32.totalorder %s111, %s113
      %p117 = scmp.eq.s32.totalorder %s14, 0
      %p118 = por %p116, %p117
      %p119 = scmp.ne.s32.totalorder %s111, %s113
      %p120 = scmp.eq.s32.totalorder %s19, 4
      %p121 = por %p119, %p120
      %p122 = scmp.ne.s32.totalorder %s113, %s114
      %p123 = scmp.eq.s32.totalorder %s19, 0
      %p124 = por %p122, %p123
      %p125 = scmp.ne.s32.totalorder %s113, %s114
      %p126 = scmp.eq.s32.totalorder %s20, 4
      %p127 = por %p125, %p126
      %p129 = scmp.ne.s32.totalorder %s114, %s128
      %p130 = scmp.eq.s32.totalorder %s20, 0
      %p131 = por %p129, %p130
      %p132 = scmp.le.s32.totalorder 1, %s14
      %p133 = scmp.lt.s32.totalorder %s14, 6
      %p134 = pnand %p132, %p133
      %p135 = pneg %p134
      // Predicated region
      $region9: #{inn_forward.1} parent=5 // pred_check
        _
      $region10: #{inn_forward.1} parent=5 // pred_check_branch
        %137 = sbr.rel (%p134) target = $region12
      $region11: #{inn_forward.1} parent=5 // pred_region
        %s138 = ssub.s32 %s14, 1
        // Predicated region
        $region13: #{inn_forward.1} parent=11 // pred_check
          %p139 = pneg %p35
        $region14: #{inn_forward.1} parent=11 // pred_check_branch
          %141 = sbr.rel (%p139) target = $region16
        $region15: #{inn_forward.1} parent=11 // pred_region
          _
        $region16: #{inn_forward.1} parent=11 // pred_fallthru
          _
      $region12: #{inn_forward.1} parent=5 // pred_fallthru
        _
      %p142 = scmp.lt.s32.totalorder %s14, 5
      // Predicated region
      $region17: #{inn_forward.1} parent=5 // pred_check
        %p143 = pneg %p142
      $region18: #{inn_forward.1} parent=5 // pred_check_branch
        %145 = sbr.rel (%p143) target = $region20
      $region19: #{inn_forward.1} parent=5 // pred_region
        // Predicated region
        $region21: #{inn_forward.1} parent=19 // pred_check
          %p146 = pneg %p55
        $region22: #{inn_forward.1} parent=19 // pred_check_branch
          %148 = sbr.rel (%p146) target = $region24
        $region23: #{inn_forward.1} parent=19 // pred_region
          %s149 = sand.u32 %s45, 1
          %s150 = scalar_lea.sflag [#allocation5], %s149
          %s151 = sand.u32 %s45, 1
          %s152 = smul.addr %s151, 304
          %s153 = scalar_lea.vmem [#allocation4], %s152
          %s154 = smul.u32 38, %s14
          %s156 = ssub.s32 4864, 4864
          %157 = vsyncadd %s150, %s156
          %s158 = smul.addr %s154, 2
          %s159 = smul.addr %s158, 64
          %s160 = scalar_lea.hbm %s1, %s159
          %s161 = sshll.u32 %s153, 4
          %s162 = int_to_ptr.vmem [resolvable:$true] %s161
          %167 = dma.hbm_to_vmem [thread:$0]  %s160, 4864, %s162, %s150, 128, 128, 8
        $region24: #{inn_forward.1} parent=19 // pred_fallthru
          _
      $region20: #{inn_forward.1} parent=5 // pred_fallthru
        _
      %p168 = scmp.le.s32.totalorder 1, %s14
      %p169 = scmp.lt.s32.totalorder %s14, 6
      %p170 = pnand %p168, %p169
      %p171 = pneg %p170
      // Predicated region
      $region25: #{inn_forward.1} parent=5 // pred_check
        _
      $region26: #{inn_forward.1} parent=5 // pred_check_branch
        %173 = sbr.rel (%p170) target = $region28
      $region27: #{inn_forward.1} parent=5 // pred_region
        %s174 = ssub.s32 %s14, 1
        %s175 = sand.u32 %s48, 1
        %s176 = scalar_lea.sflag [#allocation5], %s175
        %s177 = sand.u32 %s48, 1
        %s178 = smul.addr %s177, 304
        %s179 = scalar_lea.vmem [#allocation4], %s178
        // Predicated region
        $region29: #{inn_forward.1} parent=27 // pred_check
          %p180 = pneg %p61
        $region30: #{inn_forward.1} parent=27 // pred_check_branch
          %182 = sbr.rel (%p180) target = $region32
        $region31: #{inn_forward.1} parent=27 // pred_region
          %183 = dma.done %s176, 4864
        $region32: #{inn_forward.1} parent=27 // pred_fallthru
          _
        %p184 = pneg %p35
        %p185 = pneg %p32
        %s186 = sand.u32 %s48, 1
        %s187 = scalar_lea.sflag [#allocation5], %s186
        %s188 = sand.u32 %s48, 1
        %s189 = smul.addr %s188, 304
        %s190 = scalar_lea.vmem [#allocation4], %s189
        %p191 = pneg %p61
        %p192 = pneg %p58
        %p193 = pneg %p82
        %p194 = pneg %p79
        %p195 = pneg %p103
        %p196 = pneg %p100
        %p197 = pneg %p124
        %p198 = pneg %p121
        %s199 = smul.u32 38, %s19
        %p201 = scmp.eq.s32.totalorder %s19, 0
        // Predicated region
        $region33: #{inn_forward.1} parent=27 // pred_check
          %p202 = pneg %p201
        $region34: #{inn_forward.1} parent=27 // pred_check_branch
          %204 = sbr.rel (%p202) target = $region36
        $region35: #{inn_forward.1} parent=27 // pred_region
          %v205 = vld [vmem:[%s0] sm:$0xff]
          %v206 = vld [vmem:[%s0 + $0x8] sm:$0xff]
          %v207 = vld [vmem:[%s179] sm:$0x11]
          %v208 = vunpack.c.l.bf16 %v207
          %v209 = vunpack.c.h.bf16 %v207
          %vm210 = vcmask 7168
          %v211 = vsel %vm210, %v205, 0.0
          %v212 = vsel %vm210, %v206, 0.0
          %v213 = vadd.f32 %v211, %v212
          %v214 = vrot.slane %v213, 4
          %v215 = vadd.f32 %v213, %v214
          %v216 = vrot.slane %v215, 2
          %v217 = vadd.f32 %v215, %v216
          %v218 = vrot.slane %v217, 1
          %v219 = vadd.f32 %v217, %v218
          %v220 = vmul.f32 %v219, 0.0625
          %v221 = vsub.f32 %v205, %v220
          %v222 = vsub.f32 %v206, %v220
          %v223 = vmul.f32 %v221, %v221
          %v224 = vmul.f32 %v222, %v222
          %v225 = vsel %vm210, %v223, 0.0
          %v226 = vsel %vm210, %v224, 0.0
          %v227 = vadd.f32 %v225, %v226
          %v228 = vrot.slane %v227, 4
          %v229 = vadd.f32 %v227, %v228
          %v230 = vrot.slane %v229, 2
          %v231 = vadd.f32 %v229, %v230
          %v232 = vrot.slane %v231, 1
          %v233 = vadd.f32 %v231, %v232
          %v234 = vmul.f32 %v233, 0.0625
          %v235 = vadd.f32 %v234, 1e-05
          %v236 = vrsqrt.pop %v235
          %vm237 = vcmask 23560
          %v238 = vsel %vm237, %v205, 0.0
          %v239 = vsel %vm237, %v206, 0.0
          %v240 = vadd.f32 %v238, %v239
          %v241 = vrot.slane %v240, 4
          %v242 = vadd.f32 %v240, %v241
          %v243 = vrot.slane %v242, 2
          %v244 = vadd.f32 %v242, %v243
          %v245 = vrot.slane %v244, 1
          %v246 = vadd.f32 %v244, %v245
          %v247 = vmul.f32 %v246, 0.0625
          %v248 = vsub.f32 %v205, %v247
          %v249 = vsub.f32 %v206, %v247
          %v250 = vmul.f32 %v248, %v248
          %v251 = vmul.f32 %v249, %v249
          %v252 = vsel %vm237, %v250, 0.0
          %v253 = vsel %vm237, %v251, 0.0
          %v254 = vadd.f32 %v252, %v253
          %v255 = vrot.slane %v254, 4
          %v256 = vadd.f32 %v254, %v255
          %v257 = vrot.slane %v256, 2
          %v258 = vadd.f32 %v256, %v257
          %v259 = vrot.slane %v258, 1
          %v260 = vadd.f32 %v258, %v259
          %v261 = vmul.f32 %v260, 0.0625
          %v262 = vadd.f32 %v261, 1e-05
          %v263 = vrsqrt.pop %v262
          %v264 = vmul.f32 %v236, %v208
          %v265 = vlaneseq
          %v266 = vshrl.u32 %v265, 7
          %v267 = vsub.s32 0, %v266
          %v268 = vrot.slane %v264, %v267
          %v269 = vmul.f32 %v221, %v268
          %v270 = vmul.f32 %v222, %v268
          %v271 = vlaneseq
          %v272 = vshrl.u32 %v271, 7
          %v273 = vsub.s32 1, %v272
          %v274 = vrot.slane %v208, %v273
          %v275 = vadd.f32 %v269, %v274
          %v276 = vadd.f32 %v270, %v274
          %278 = vrot.lane.b32.xlu0 %v209, 1
          %v279 = vpop.permute.xlu0 %278
          %v281 = vmul.f32 %v263, %v279
          %v282 = vlaneseq
          %v283 = vshrl.u32 %v282, 7
          %v284 = vsub.s32 0, %v283
          %v285 = vrot.slane %v281, %v284
          %v286 = vmul.f32 %v248, %v285
          %v287 = vmul.f32 %v249, %v285
          %v288 = vlaneseq
          %v289 = vshrl.u32 %v288, 7
          %v290 = vsub.s32 1, %v289
          %v291 = vrot.slane %v209, %v290
          %293 = vrot.lane.b32.xlu0 %v291, 1
          %v294 = vpop.permute.xlu0 %293
          %v296 = vadd.f32 %v286, %v294
          %v297 = vadd.f32 %v287, %v294
          %v298 = vand.u32 2147483647, %v208
          %v299 = vmul.f32 %v298, %v236
          %v300 = vlog2.pop %v299
          %v301 = vmul.f32 %v300, 0.6931472
          %v302 = vadd.f32 %v301, 0.0
          %v303 = vand.u32 2147483647, %v209
          %305 = vrot.lane.b32.xlu0 %v263, 127
          %v306 = vpop.permute.xlu0 %305
          %v308 = vmul.f32 %v303, %v306
          %v309 = vlog2.pop %v308
          %v310 = vmul.f32 %v309, 0.6931472
          %vm311 = vcmask 8192
          %v312 = vsel %vm311, %v310, 0.0
          %313 = vadd.xlane.f32.xlu0 %v312
          %v314 = vpop.xlane.xlu0 %313
          %v315 = vadd.f32 %v302, %v314
          %v316 = vld [vmem:[%s179 + $0x8] sm:$0x1]
          %v317 = vunpack.c.l.bf16 %v316
          %v318 = vld [vmem:[%s179] sm:$0x22]
          %v319 = vunpack.c.l.bf16 %v318
          %321 = vset.pattern.permute.xlu0 0
          %322 = vperm.xlu0 %321, %v275
          %v323 = vpop.permute.xlu0 %322
          %326 = vset.pattern.permute.xlu0 0
          %327 = vperm.xlu0 %326, %v276
          %v328 = vpop.permute.xlu0 %327
          %v330 = vlaneseq
          %v331 = vshrl.u32 %v330, 7
          %v332 = vsub.s32 0, %v331
          %v333 = vrot.slane %v317, %v332
          %v334 = vmul.f32 %v323, %v333
          %v335 = vmul.f32 %v328, %v333
          %v336 = vlaneseq
          %v337 = vshrl.u32 %v336, 7
          %v338 = vsub.s32 3, %v337
          %v339 = vrot.slane %v319, %v338
          %v340 = vadd.f32 %v334, %v339
          %v341 = vadd.f32 %v335, %v339
          %v342 = vmax.f32 %v340, 0.0
          %v343 = vmax.f32 %v341, 0.0
          %v344 = vld [vmem:[%s179 + $0x10] sm:$0xff]
          %v345 = vld [vmem:[%s179 + $0x18] sm:$0x33]
          %v346 = vunpack.c.l.bf16 %v344
          %v347 = vunpack.c.h.bf16 %v344
          %v348 = vunpack.c.l.bf16 %v345
          %v349 = vunpack.c.h.bf16 %v345
          %v350 = vld [vmem:[%s179] sm:$0x44]
          %v351 = vunpack.c.l.bf16 %v350
          %v352 = vunpack.c.h.bf16 %v350
          %v353 = vlaneseq
          %v354 = vshrl.u32 %v353, 7
          %v355 = vsub.s32 4, %v354
          %v356 = vrot.slane %v351, %v355
          %v357 = vlaneseq
          %v358 = vshrl.u32 %v357, 7
          %v359 = vsub.s32 4, %v358
          %v360 = vrot.slane %v352, %v359
          %vm361 = vcmask 97280
          %v363 = vsel %vm361, %v342, 0
          %v366 = vsel %vm361, %v343, 0
          %vm368 = vcmask 1043456
          %v370 = vsel %vm368, %v348, 0
          %v373 = vsel %vm368, %v349, 0
          %375 = vmatprep.subr.mxu0 %v347
          %376 = vmatpush1.msra.mxu0 %v346
          %377 = vmatprep.subr.mxu0 %v373
          %378 = vmatpush1.msra.mxu0 %v370
          %379 = vmatprep.subr.mxu0 0.0
          %380 = vmatpush1.msra.mxu0 0.0
          %381 = vmatprep.subr.mxu0 0.0
          %382 = vmatpush1.msra.mxu0 0.0
          %383 = vmatprep.subr.mxu0 0.0
          %384 = vmatpush1.msra.mxu0 0.0
          %385 = vmatprep.subr.mxu0 0.0
          %386 = vmatpush1.msra.mxu0 0.0
          %387 = vmatprep.subr.mxu0 0.0
          %388 = vmatpush1.msra.mxu0 0.0
          %389 = vmatprep.subr.mxu0 0.0
          %390 = vmatpush1.msra.mxu0 0.0
          %391 = vmatprep.subr.mxu0 0.0
          %392 = vmatpush1.msra.mxu0 0.0
          %393 = vmatprep.subr.mxu0 0.0
          %394 = vmatpush1.msra.mxu0 0.0
          %395 = vmatprep.subr.mxu0 0.0
          %396 = vmatpush1.msra.mxu0 0.0
          %397 = vmatprep.subr.mxu0 0.0
          %398 = vmatpush1.msra.mxu0 0.0
          %399 = vmatprep.subr.mxu0 0.0
          %400 = vmatpush1.msra.mxu0 0.0
          %401 = vmatprep.subr.mxu0 0.0
          %402 = vmatpush1.msra.mxu0 0.0
          %403 = vmatprep.subr.mxu0 0.0
          %404 = vmatpush1.msra.mxu0 0.0
          %405 = vmatprep.subr.mxu0 0.0
          %406 = vmatpush1.msra.mxu0 0.0
          %407 = vmatprep.subr.mxu0 0.0
          %408 = vmatpush1.msra.mxu0 0.0
          %409 = vmatprep.subr.mxu0 0.0
          %410 = vmatpush1.msra.mxu0 0.0
          %411 = vmatprep.subr.mxu0 0.0
          %412 = vmatpush1.msra.mxu0 0.0
          %413 = vmatprep.subr.mxu0 0.0
          %414 = vmatpush1.msra.mxu0 0.0
          %415 = vmatprep.subr.mxu0 0.0
          %416 = vmatpush1.msra.mxu0 0.0
          %417 = vmatprep.subr.mxu0 0.0
          %418 = vmatpush1.msra.mxu0 0.0
          %419 = vmatprep.subr.mxu0 0.0
          %420 = vmatpush1.msra.mxu0 0.0
          %421 = vmatprep.subr.mxu0 0.0
          %422 = vmatpush1.msra.mxu0 0.0
          %423 = vmatprep.subr.mxu0 0.0
          %424 = vmatpush1.msra.mxu0 0.0
          %425 = vmatprep.subr.mxu0 0.0
          %426 = vmatpush1.msra.mxu0 0.0
          %427 = vmatprep.subr.mxu0 0.0
          %428 = vmatpush1.msra.mxu0 0.0
          %429 = vmatprep.subr.mxu0 0.0
          %430 = vmatpush1.msra.mxu0 0.0
          %431 = vmatprep.subr.mxu0 0.0
          %432 = vmatpush1.msra.mxu0 0.0
          %433 = vmatprep.subr.mxu0 0.0
          %434 = vmatpush1.msra.mxu0 0.0
          %435 = vmatprep.subr.mxu0 0.0
          %436 = vmatpush1.msra.mxu0 0.0
          %437 = vmatprep.subr.mxu0 0.0
          %438 = vmatpush1.msra.mxu0 0.0
          %439 = vmatprep.mubr.f32.mxu0 0.0
          %440 = vmatmul.mubr.f32.gmra.mrb[0].mxu0 %v363
          %v441 = vpop.f32.mrb[0].mxu0
          %v442 = vadd.f32 %v356, %v441
          %v443 = vpop.f32.mrb[0].mxu0
          %v444 = vadd.f32 %v360, %v443
          %445 = vmatprep.mubr.f32.mxu0 0.0
          %446 = vmatmul.mubr.f32.gmra.mrb[0].mxu0 %v366
          %v447 = vpop.f32.mrb[0].mxu0
          %v448 = vadd.f32 %v356, %v447
          %v449 = vpop.f32.mrb[0].mxu0
          %v450 = vadd.f32 %v360, %v449
          %451 = vdwg.mxu0
          %v452 = vmul.f32 %v442, 1.442695
          %v453 = vpow.pop %v452
          %v454 = vmul.f32 %v448, 1.442695
          %v455 = vpow.pop %v454
          %458 = vrot.lane.b32.xlu0 %v453, 1
          %v459 = vpop.permute.xlu0 %458
          %460 = vrot.lane.b32.xlu0 %v455, 1
          %v461 = vpop.permute.xlu0 %460
          %v464 = vmul.f32 %v296, %v459
          %v465 = vmul.f32 %v297, %v461
          %468 = vrot.lane.b32.xlu0 %v444, 1
          %v469 = vpop.permute.xlu0 %468
          %470 = vrot.lane.b32.xlu0 %v450, 1
          %v471 = vpop.permute.xlu0 %470
          %v474 = vadd.f32 %v464, %v469
          %v475 = vadd.f32 %v465, %v471
          %vm476 = vcmask 15360
          %v477 = vsel %vm476, %v442, 0.0
          %478 = vadd.xlane.f32.xlu0 %v477
          %v479 = vpop.xlane.xlu0 %478
          %v480 = vsel %vm476, %v448, 0.0
          %481 = vadd.xlane.f32.xlu0 %v480
          %v482 = vpop.xlane.xlu0 %481
          %v483 = vld [vmem:[%s179 + $0x20] sm:$0x11]
          %v484 = vunpack.c.l.bf16 %v483
          %v485 = vunpack.c.h.bf16 %v483
          %v486 = vld [vmem:[%s179 + $0x28] sm:$0x11]
          %v487 = vunpack.c.l.bf16 %v486
          %v488 = vunpack.c.h.bf16 %v486
          %v489 = vlaneseq
          %v490 = vshrl.u32 %v489, 7
          %v491 = vsub.s32 0, %v490
          %v492 = vrot.slane %v484, %v491
          %v493 = vlaneseq
          %v494 = vshrl.u32 %v493, 7
          %v495 = vsub.s32 0, %v494
          %v496 = vrot.slane %v485, %v495
          %v497 = vmul.f32 %v323, %v492
          %v498 = vmul.f32 %v323, %v496
          %v499 = vmul.f32 %v328, %v492
          %v500 = vmul.f32 %v328, %v496
          %v501 = vlaneseq
          %v502 = vshrl.u32 %v501, 7
          %v503 = vsub.s32 5, %v502
          %v504 = vrot.slane %v351, %v503
          %v505 = vlaneseq
          %v506 = vshrl.u32 %v505, 7
          %v507 = vsub.s32 5, %v506
          %v508 = vrot.slane %v352, %v507
          %v509 = vadd.f32 %v497, %v504
          %v510 = vadd.f32 %v498, %v508
          %v511 = vadd.f32 %v499, %v504
          %v512 = vadd.f32 %v500, %v508
          %514 = vset.pattern.permute.xlu0 1
          %515 = vperm.xlu0 %514, %v474
          %v516 = vpop.permute.xlu0 %515
          %519 = vset.pattern.permute.xlu0 1
          %520 = vperm.xlu0 %519, %v475
          %v521 = vpop.permute.xlu0 %520
          %v523 = vlaneseq
          %v524 = vshrl.u32 %v523, 7
          %v525 = vsub.s32 0, %v524
          %v526 = vrot.slane %v487, %v525
          %v527 = vlaneseq
          %v528 = vshrl.u32 %v527, 7
          %v529 = vsub.s32 0, %v528
          %v530 = vrot.slane %v488, %v529
          %v531 = vmul.f32 %v516, %v526
          %v532 = vmul.f32 %v516, %v530
          %v533 = vmul.f32 %v521, %v526
          %v534 = vmul.f32 %v521, %v530
          %v535 = vadd.f32 %v509, %v531
          %v536 = vadd.f32 %v510, %v532
          %v537 = vadd.f32 %v511, %v533
          %v538 = vadd.f32 %v512, %v534
          %539 = vset.pattern.permute.xlu0 2
          %540 = vperm.xlu0 %539, %v474
          %v541 = vpop.permute.xlu0 %540
          %543 = vset.pattern.permute.xlu0 2
          %544 = vperm.xlu0 %543, %v475
          %v545 = vpop.permute.xlu0 %544
          %v547 = vlaneseq
          %v548 = vshrl.u32 %v547, 7
          %v549 = vsub.s32 1, %v548
          %v550 = vrot.slane %v487, %v549
          %v551 = vlaneseq
          %v552 = vshrl.u32 %v551, 7
          %v553 = vsub.s32 1, %v552
          %v554 = vrot.slane %v488, %v553
          %v555 = vmul.f32 %v541, %v550
          %v556 = vmul.f32 %v541, %v554
          %v557 = vmul.f32 %v545, %v550
          %v558 = vmul.f32 %v545, %v554
          %v559 = vadd.f32 %v535, %v555
          %v560 = vadd.f32 %v536, %v556
          %v561 = vadd.f32 %v537, %v557
          %v562 = vadd.f32 %v538, %v558
          %563 = vst [vmem:[#allocation2] sm:$0xff] %v559
          %564 = vst [vmem:[#allocation2 + $0x8] sm:$0xff] %v560
          %565 = vst [vmem:[#allocation2 + $0x10] sm:$0xff] %v561
          %566 = vst [vmem:[#allocation2 + $0x18] sm:$0xff] %v562
          %v567 = vlaneseq
          %v568 = vshrl.u32 %v567, 7
          %v569 = vsub.s32 0, %v568
          %v570 = vrot.slane %v315, %v569
          %v571 = vadd.f32 %v479, %v570
          %v572 = vadd.f32 %v482, %v570
          %573 = vst.msk [vmem:[#allocation3] sm:$0xff] %vm210, %v571
          %574 = vst.msk [vmem:[#allocation3 + $0x8] sm:$0xff] %vm210, %v572
        $region36: #{inn_forward.1} parent=27 // pred_fallthru
          _
        %p575 = scmp.gt.s32.totalorder %s19, 0
        // Predicated region
        $region37: #{inn_forward.1} parent=27 // pred_check
          %p576 = pneg %p575
        $region38: #{inn_forward.1} parent=27 // pred_check_branch
          %578 = sbr.rel (%p576) target = $region40
        $region39: #{inn_forward.1} parent=27 // pred_region
          %v579 = vld [vmem:[#allocation2] sm:$0xff]
          %v580 = vld [vmem:[#allocation2 + $0x8] sm:$0xff]
          %v581 = vld [vmem:[#allocation2 + $0x10] sm:$0xff]
          %v582 = vld [vmem:[#allocation2 + $0x18] sm:$0xff]
          %v583 = vld [vmem:[%s179] sm:$0x11]
          %v584 = vunpack.c.l.bf16 %v583
          %v585 = vunpack.c.h.bf16 %v583
          %v586 = vld [vmem:[%s179] sm:$0x22]
          %v587 = vunpack.c.l.bf16 %v586
          %v588 = vunpack.c.h.bf16 %v586
          %v589 = vadd.f32 %v579, %v581
          %v590 = vrot.slane %v589, 4
          %v591 = vadd.f32 %v589, %v590
          %v592 = vrot.slane %v591, 2
          %v593 = vadd.f32 %v591, %v592
          %v594 = vrot.slane %v593, 1
          %v595 = vadd.f32 %v593, %v594
          %v596 = vadd.f32 %v580, %v582
          %v597 = vrot.slane %v596, 4
          %v598 = vadd.f32 %v596, %v597
          %v599 = vrot.slane %v598, 2
          %v600 = vadd.f32 %v598, %v599
          %v601 = vrot.slane %v600, 1
          %v602 = vadd.f32 %v600, %v601
          %v603 = vmul.f32 %v595, 0.0625
          %v604 = vmul.f32 %v602, 0.0625
          %v605 = vsub.f32 %v579, %v603
          %v606 = vsub.f32 %v580, %v604
          %v607 = vsub.f32 %v581, %v603
          %v608 = vsub.f32 %v582, %v604
          %v609 = vmul.f32 %v605, %v605
          %v610 = vmul.f32 %v606, %v606
          %v611 = vmul.f32 %v607, %v607
          %v612 = vmul.f32 %v608, %v608
          %v613 = vadd.f32 %v609, %v611
          %v614 = vrot.slane %v613, 4
          %v615 = vadd.f32 %v613, %v614
          %v616 = vrot.slane %v615, 2
          %v617 = vadd.f32 %v615, %v616
          %v618 = vrot.slane %v617, 1
          %v619 = vadd.f32 %v617, %v618
          %v620 = vadd.f32 %v610, %v612
          %v621 = vrot.slane %v620, 4
          %v622 = vadd.f32 %v620, %v621
          %v623 = vrot.slane %v622, 2
          %v624 = vadd.f32 %v622, %v623
          %v625 = vrot.slane %v624, 1
          %v626 = vadd.f32 %v624, %v625
          %v627 = vmul.f32 %v619, 0.0625
          %v628 = vmul.f32 %v626, 0.0625
          %v629 = vadd.f32 %v627, 1e-05
          %v630 = vadd.f32 %v628, 1e-05
          %v631 = vrsqrt.pop %v629
          %v632 = vrsqrt.pop %v630
          %v633 = vmul.f32 %v631, %v584
          %v634 = vmul.f32 %v632, %v585
          %v635 = vlaneseq
          %v636 = vshrl.u32 %v635, 7
          %v637 = vsub.s32 0, %v636
          %v638 = vrot.slane %v633, %v637
          %v639 = vlaneseq
          %v640 = vshrl.u32 %v639, 7
          %v641 = vsub.s32 0, %v640
          %v642 = vrot.slane %v634, %v641
          %v643 = vmul.f32 %v605, %v638
          %v644 = vmul.f32 %v606, %v642
          %v645 = vmul.f32 %v607, %v638
          %v646 = vmul.f32 %v608, %v642
          %v647 = vlaneseq
          %v648 = vshrl.u32 %v647, 7
          %v649 = vsub.s32 1, %v648
          %v650 = vrot.slane %v584, %v649
          %v651 = vlaneseq
          %v652 = vshrl.u32 %v651, 7
          %v653 = vsub.s32 1, %v652
          %v654 = vrot.slane %v585, %v653
          %v655 = vadd.f32 %v643, %v650
          %v656 = vadd.f32 %v644, %v654
          %v657 = vadd.f32 %v645, %v650
          %v658 = vadd.f32 %v646, %v654
          %v659 = vand.u32 2147483647, %v584
          %v660 = vand.u32 2147483647, %v585
          %v661 = vmul.f32 %v659, %v631
          %v662 = vmul.f32 %v660, %v632
          %v663 = vlog2.pop %v661
          %v664 = vmul.f32 %v663, 0.6931472
          %v665 = vlog2.pop %v662
          %v666 = vmul.f32 %v665, 0.6931472
          %v669 = vrot.slane %v587, 2
          %v670 = vrot.slane %v588, 2
          %v673 = vmul.f32 %v664, %v669
          %v674 = vmul.f32 %v666, %v670
          %vm675 = vcmask 1040384
          %v676 = vsel %vm675, %v673, 0.0
          %v677 = vsel %vm675, %v674, 0.0
          %v678 = vadd.f32 %v676, %v677
          %679 = vadd.xlane.f32.xlu0 %v678
          %v680 = vpop.xlane.xlu0 %679
          %v681 = vld [vmem:[%s179 + $0x8] sm:$0xff]
          %v682 = vld [vmem:[%s179 + $0x10] sm:$0xff]
          %v683 = vld [vmem:[%s179 + $0x18] sm:$0xff]
          %v684 = vld [vmem:[%s179 + $0x20] sm:$0xff]
          %v685 = vpack.c.bf16 %v657, %v655
          %v686 = vlaneseq
          %v687 = vshrl.u32 %v686, 7
          %v688 = vsub.s32 3, %v687
          %v689 = vrot.slane %v587, %v688
          %v690 = vlaneseq
          %v691 = vshrl.u32 %v690, 7
          %v692 = vsub.s32 3, %v691
          %v693 = vrot.slane %v588, %v692
          %v698 = vunpack.c.l.b16 %v681
          %v699 = vunpack.c.h.b16 %v681
          %v700 = vunpack.c.l.b16 %v682
          %v701 = vunpack.c.h.b16 %v682
          %v702 = vunpack.c.l.b16 %v683
          %v703 = vunpack.c.h.b16 %v683
          %v704 = vunpack.c.l.b16 %v684
          %v705 = vunpack.c.h.b16 %v684
          %v706 = vpack.c.b16 %v700, %v698
          %v707 = vpack.c.b16 %v701, %v699
          %v708 = vpack.c.b16 %v704, %v702
          %v709 = vpack.c.b16 %v705, %v703
          %vm714 = vcmask 261120
          %v716 = vsel %vm714, %v685, 0
          %718 = vmatprep.subr.bf16.mxu0 %v707
          %719 = vmatpush1.bf16.msra.mxu0 %v706
          %720 = vmatprep.subr.bf16.mxu0 %v709
          %721 = vmatpush1.bf16.msra.mxu0 %v708
          %722 = vmatprep.subr.bf16.mxu0 0
          %723 = vmatpush1.bf16.msra.mxu0 0
          %724 = vmatprep.subr.bf16.mxu0 0
          %725 = vmatpush1.bf16.msra.mxu0 0
          %726 = vmatprep.subr.bf16.mxu0 0
          %727 = vmatpush1.bf16.msra.mxu0 0
          %728 = vmatprep.subr.bf16.mxu0 0
          %729 = vmatpush1.bf16.msra.mxu0 0
          %730 = vmatprep.subr.bf16.mxu0 0
          %731 = vmatpush1.bf16.msra.mxu0 0
          %732 = vmatprep.subr.bf16.mxu0 0
          %733 = vmatpush1.bf16.msra.mxu0 0
          %734 = vmatprep.subr.bf16.mxu0 0
          %735 = vmatpush1.bf16.msra.mxu0 0
          %736 = vmatprep.subr.bf16.mxu0 0
          %737 = vmatpush1.bf16.msra.mxu0 0
          %738 = vmatprep.subr.bf16.mxu0 0
          %739 = vmatpush1.bf16.msra.mxu0 0
          %740 = vmatprep.subr.bf16.mxu0 0
          %741 = vmatpush1.bf16.msra.mxu0 0
          %742 = vmatprep.subr.bf16.mxu0 0
          %743 = vmatpush1.bf16.msra.mxu0 0
          %744 = vmatprep.subr.bf16.mxu0 0
          %745 = vmatpush1.bf16.msra.mxu0 0
          %746 = vmatprep.subr.bf16.mxu0 0
          %747 = vmatpush1.bf16.msra.mxu0 0
          %748 = vmatprep.subr.bf16.mxu0 0
          %749 = vmatpush1.bf16.msra.mxu0 0
          %750 = vmatprep.mubr.bf16.mxu0 0
          %751 = vmatmul.mubr.bf16.gmra.mrb[0].mxu0 %v716
          %v752 = vpop.f32.mrb[0].mxu0
          %v753 = vadd.f32 %v689, %v752
          %v754 = vpop.f32.mrb[0].mxu0
          %v755 = vadd.f32 %v693, %v754
          %v756 = vpop.f32.mrb[0].mxu0
          %v757 = vadd.f32 %v689, %v756
          %v758 = vpop.f32.mrb[0].mxu0
          %v759 = vadd.f32 %v693, %v758
          %760 = vdwg.mxu0
          %v761 = vmax.f32 %v753, 0.0
          %v762 = vmax.f32 %v755, 0.0
          %v763 = vmax.f32 %v757, 0.0
          %v764 = vmax.f32 %v759, 0.0
          %v765 = vld [vmem:[%s179 + $0x28] sm:$0xff]
          %v766 = vld [vmem:[%s179 + $0x30] sm:$0xff]
          %v767 = vld [vmem:[%s179 + $0x38] sm:$0xff]
          %v768 = vld [vmem:[%s179 + $0x40] sm:$0xff]
          %v769 = vld [vmem:[%s179 + $0x48] sm:$0xff]
          %v770 = vld [vmem:[%s179 + $0x50] sm:$0xff]
          %v771 = vld [vmem:[%s179 + $0x58] sm:$0xff]
          %v772 = vld [vmem:[%s179 + $0x60] sm:$0xff]
          %v773 = vld [vmem:[%s179 + $0x68] sm:$0xff]
          %v774 = vld [vmem:[%s179 + $0x70] sm:$0xff]
          %v775 = vld [vmem:[%s179 + $0x78] sm:$0xff]
          %v776 = vld [vmem:[%s179 + $0x80] sm:$0xff]
          %v777 = vld [vmem:[%s179 + $0x88] sm:$0xff]
          %v778 = vld [vmem:[%s179 + $0x90] sm:$0xff]
          %v779 = vld [vmem:[%s179 + $0x98] sm:$0xff]
          %v780 = vld [vmem:[%s179 + $0xa0] sm:$0xff]
          %v781 = vld [vmem:[%s179 + $0xa8] sm:$0xff]
          %v782 = vld [vmem:[%s179 + $0xb0] sm:$0xff]
          %v783 = vld [vmem:[%s179 + $0xb8] sm:$0xff]
          %v784 = vld [vmem:[%s179 + $0xc0] sm:$0xff]
          %v785 = vld [vmem:[%s179 + $0xc8] sm:$0xff]
          %v786 = vld [vmem:[%s179 + $0xd0] sm:$0xff]
          %v787 = vld [vmem:[%s179 + $0xd8] sm:$0xff]
          %v788 = vld [vmem:[%s179 + $0xe0] sm:$0xff]
          %v789 = vld [vmem:[%s179 + $0xe8] sm:$0xff]
          %v790 = vld [vmem:[%s179] sm:$0x44]
          %v791 = vunpack.c.l.bf16 %v790
          %v792 = vunpack.c.h.bf16 %v790
          %v793 = vpack.c.bf16 %v763, %v761
          %v794 = vpack.c.bf16 %v764, %v762
          %v795 = vlaneseq
          %v796 = vshrl.u32 %v795, 7
          %v797 = vsub.s32 4, %v796
          %v798 = vrot.slane %v791, %v797
          %v799 = vlaneseq
          %v800 = vshrl.u32 %v799, 7
          %v801 = vsub.s32 4, %v800
          %v802 = vrot.slane %v792, %v801
          %v828 = vunpack.c.l.b16 %v765
          %v829 = vunpack.c.h.b16 %v765
          %v830 = vunpack.c.l.b16 %v766
          %v831 = vunpack.c.h.b16 %v766
          %v832 = vunpack.c.l.b16 %v767
          %v833 = vunpack.c.h.b16 %v767
          %v834 = vunpack.c.l.b16 %v768
          %v835 = vunpack.c.h.b16 %v768
          %v836 = vunpack.c.l.b16 %v769
          %v837 = vunpack.c.h.b16 %v769
          %v838 = vunpack.c.l.b16 %v770
          %v839 = vunpack.c.h.b16 %v770
          %v840 = vunpack.c.l.b16 %v771
          %v841 = vunpack.c.h.b16 %v771
          %v842 = vunpack.c.l.b16 %v772
          %v843 = vunpack.c.h.b16 %v772
          %v844 = vunpack.c.l.b16 %v773
          %v845 = vunpack.c.h.b16 %v773
          %v846 = vunpack.c.l.b16 %v774
          %v847 = vunpack.c.h.b16 %v774
          %v848 = vunpack.c.l.b16 %v775
          %v849 = vunpack.c.h.b16 %v775
          %v850 = vunpack.c.l.b16 %v776
          %v851 = vunpack.c.h.b16 %v776
          %v852 = vunpack.c.l.b16 %v777
          %v853 = vunpack.c.h.b16 %v777
          %v854 = vunpack.c.l.b16 %v778
          %v855 = vunpack.c.h.b16 %v778
          %v856 = vunpack.c.l.b16 %v779
          %v857 = vunpack.c.h.b16 %v779
          %v858 = vunpack.c.l.b16 %v780
          %v859 = vunpack.c.h.b16 %v780
          %v860 = vunpack.c.l.b16 %v781
          %v861 = vunpack.c.h.b16 %v781
          %v862 = vunpack.c.l.b16 %v782
          %v863 = vunpack.c.h.b16 %v782
          %v864 = vunpack.c.l.b16 %v783
          %v865 = vunpack.c.h.b16 %v783
          %v866 = vunpack.c.l.b16 %v784
          %v867 = vunpack.c.h.b16 %v784
          %v868 = vunpack.c.l.b16 %v785
          %v869 = vunpack.c.h.b16 %v785
          %v870 = vunpack.c.l.b16 %v786
          %v871 = vunpack.c.h.b16 %v786
          %v872 = vunpack.c.l.b16 %v787
          %v873 = vunpack.c.h.b16 %v787
          %v874 = vunpack.c.l.b16 %v788
          %v875 = vunpack.c.h.b16 %v788
          %v876 = vunpack.c.l.b16 %v789
          %v877 = vunpack.c.h.b16 %v789
          %v878 = vpack.c.b16 %v830, %v828
          %v879 = vpack.c.b16 %v831, %v829
          %v880 = vpack.c.b16 %v834, %v832
          %v881 = vpack.c.b16 %v835, %v833
          %v882 = vpack.c.b16 %v838, %v836
          %v883 = vpack.c.b16 %v839, %v837
          %v884 = vpack.c.b16 %v842, %v840
          %v885 = vpack.c.b16 %v843, %v841
          %v886 = vpack.c.b16 %v846, %v844
          %v887 = vpack.c.b16 %v847, %v845
          %v888 = vpack.c.b16 %v850, %v848
          %v889 = vpack.c.b16 %v851, %v849
          %v890 = vpack.c.b16 %v854, %v852
          %v891 = vpack.c.b16 %v855, %v853
          %v892 = vpack.c.b16 %v858, %v856
          %v893 = vpack.c.b16 %v859, %v857
          %v894 = vpack.c.b16 %v862, %v860
          %v895 = vpack.c.b16 %v863, %v861
          %v896 = vpack.c.b16 %v866, %v864
          %v897 = vpack.c.b16 %v867, %v865
          %v898 = vpack.c.b16 %v870, %v868
          %v899 = vpack.c.b16 %v871, %v869
          %v900 = vpack.c.b16 %v874, %v872
          %v901 = vpack.c.b16 %v875, %v873
          %v902 = vpack.c.b16 %v876, %v876
          %v903 = vpack.c.b16 %v877, %v877
          %vm928 = vcmask 588800
          %v930 = vsel %vm928, %v794, 0
          %vm932 = vcmask 1043456
          %v934 = vsel %vm932, %v902, 0
          %v937 = vsel %vm932, %v903, 0
          %939 = vmatprep.subr.bf16.mxu0 %v879
          %940 = vmatpush1.bf16.msra.mxu0 %v878
          %941 = vmatprep.subr.bf16.mxu0 %v881
          %942 = vmatpush1.bf16.msra.mxu0 %v880
          %943 = vmatprep.subr.bf16.mxu0 %v883
          %944 = vmatpush1.bf16.msra.mxu0 %v882
          %945 = vmatprep.subr.bf16.mxu0 %v885
          %946 = vmatpush1.bf16.msra.mxu0 %v884
          %947 = vmatprep.subr.bf16.mxu0 %v887
          %948 = vmatpush1.bf16.msra.mxu0 %v886
          %949 = vmatprep.subr.bf16.mxu0 %v889
          %950 = vmatpush1.bf16.msra.mxu0 %v888
          %951 = vmatprep.subr.bf16.mxu0 %v891
          %952 = vmatpush1.bf16.msra.mxu0 %v890
          %953 = vmatprep.subr.bf16.mxu0 %v893
          %954 = vmatpush1.bf16.msra.mxu0 %v892
          %955 = vmatprep.subr.bf16.mxu0 %v895
          %956 = vmatpush1.bf16.msra.mxu0 %v894
          %957 = vmatprep.subr.bf16.mxu0 %v897
          %958 = vmatpush1.bf16.msra.mxu0 %v896
          %959 = vmatprep.subr.bf16.mxu0 %v899
          %960 = vmatpush1.bf16.msra.mxu0 %v898
          %961 = vmatprep.subr.bf16.mxu0 %v901
          %962 = vmatpush1.bf16.msra.mxu0 %v900
          %963 = vmatprep.subr.bf16.mxu0 %v937
          %964 = vmatpush1.bf16.msra.mxu0 %v934
          %965 = vmatprep.subr.bf16.mxu0 0
          %966 = vmatpush1.bf16.msra.mxu0 0
          %967 = vmatprep.subr.bf16.mxu0 0
          %968 = vmatpush1.bf16.msra.mxu0 0
          %969 = vmatprep.subr.bf16.mxu0 0
          %970 = vmatpush1.bf16.msra.mxu0 0
          %971 = vmatprep.mubr.bf16.mxu0 %v930
          %972 = vmatmul.mubr.bf16.gmra.mrb[0].mxu0 %v793
          %v973 = vpop.f32.mrb[0].mxu0
          %v974 = vadd.f32 %v798, %v973
          %v975 = vpop.f32.mrb[0].mxu0
          %v976 = vadd.f32 %v802, %v975
          %v977 = vpop.f32.mrb[0].mxu0
          %v978 = vadd.f32 %v798, %v977
          %v979 = vpop.f32.mrb[0].mxu0
          %v980 = vadd.f32 %v802, %v979
          %981 = vdwg.mxu0
          %v982 = vmul.f32 %v974, 1.442695
          %v983 = vpow.pop %v982
          %v984 = vmul.f32 %v978, 1.442695
          %v985 = vpow.pop %v984
          %v986 = vmul.f32 %v656, %v983
          %v987 = vmul.f32 %v658, %v985
          %v988 = vadd.f32 %v986, %v976
          %v989 = vadd.f32 %v987, %v980
          %990 = vadd.xlane.f32.xlu0 %v974
          %v991 = vpop.xlane.xlu0 %990
          %992 = vadd.xlane.f32.xlu0 %v978
          %v993 = vpop.xlane.xlu0 %992
          %v994 = vld [vmem:[%s179 + $0xf0] sm:$0xff]
          %v995 = vld [vmem:[%s179 + $0xf8] sm:$0xff]
          %v996 = vld [vmem:[%s179 + $0x100] sm:$0xff]
          %v997 = vld [vmem:[%s179 + $0x108] sm:$0xff]
          %v998 = vld [vmem:[%s179 + $0x110] sm:$0xff]
          %v999 = vld [vmem:[%s179 + $0x118] sm:$0xff]
          %v1000 = vld [vmem:[%s179 + $0x120] sm:$0xff]
          %v1001 = vld [vmem:[%s179 + $0x128] sm:$0xff]
          %v1002 = vpack.c.bf16 %v989, %v988
          %v1007 = vunpack.c.l.b16 %v998
          %v1008 = vunpack.c.h.b16 %v998
          %v1009 = vunpack.c.l.b16 %v999
          %v1010 = vunpack.c.h.b16 %v999
          %v1011 = vunpack.c.l.b16 %v1000
          %v1012 = vunpack.c.h.b16 %v1000
          %v1013 = vunpack.c.l.b16 %v1001
          %v1014 = vunpack.c.h.b16 %v1001
          %v1015 = vpack.c.b16 %v1009, %v1007
          %v1016 = vpack.c.b16 %v1010, %v1008
          %v1017 = vpack.c.b16 %v1013, %v1011
          %v1018 = vpack.c.b16 %v1014, %v1012
          %v1024 = vsel %vm714, %v1002, 0
          %1026 = vmatprep.subr.bf16.mxu0 %v1016
          %1027 = vmatpush1.bf16.msra.mxu0 %v1015
          %1028 = vmatprep.subr.bf16.mxu0 %v1018
          %1029 = vmatpush1.bf16.msra.mxu0 %v1017
          %1030 = vmatprep.subr.bf16.mxu0 0
          %1031 = vmatpush1.bf16.msra.mxu0 0
          %1032 = vmatprep.subr.bf16.mxu0 0
          %1033 = vmatpush1.bf16.msra.mxu0 0
          %1034 = vmatprep.subr.bf16.mxu0 0
          %1035 = vmatpush1.bf16.msra.mxu0 0
          %1036 = vmatprep.subr.bf16.mxu0 0
          %1037 = vmatpush1.bf16.msra.mxu0 0
          %1038 = vmatprep.subr.bf16.mxu0 0
          %1039 = vmatpush1.bf16.msra.mxu0 0
          %1040 = vmatprep.subr.bf16.mxu0 0
          %1041 = vmatpush1.bf16.msra.mxu0 0
          %1042 = vmatprep.subr.bf16.mxu0 0
          %1043 = vmatpush1.bf16.msra.mxu0 0
          %1044 = vmatprep.subr.bf16.mxu0 0
          %1045 = vmatpush1.bf16.msra.mxu0 0
          %1046 = vmatprep.subr.bf16.mxu0 0
          %1047 = vmatpush1.bf16.msra.mxu0 0
          %1048 = vmatprep.subr.bf16.mxu0 0
          %1049 = vmatpush1.bf16.msra.mxu0 0
          %1050 = vmatprep.subr.bf16.mxu0 0
          %1051 = vmatpush1.bf16.msra.mxu0 0
          %1052 = vmatprep.subr.bf16.mxu0 0
          %1053 = vmatpush1.bf16.msra.mxu0 0
          %1054 = vmatprep.subr.bf16.mxu0 0
          %1055 = vmatpush1.bf16.msra.mxu0 0
          %1056 = vmatprep.subr.bf16.mxu0 0
          %1057 = vmatpush1.bf16.msra.mxu0 0
          %1058 = vmatprep.mubr.bf16.mxu0 0
          %1059 = vmatmul.mubr.bf16.gmra.mrb[0].mxu0 %v1024
          %v1060 = vpop.f32.mrb[0].mxu0
          %v1061 = vadd.f32 0.0, %v1060
          %v1062 = vpop.f32.mrb[0].mxu0
          %v1063 = vadd.f32 0.0, %v1062
          %v1064 = vpop.f32.mrb[0].mxu0
          %v1065 = vadd.f32 0.0, %v1064
          %v1066 = vpop.f32.mrb[0].mxu0
          %v1067 = vadd.f32 0.0, %v1066
          %1068 = vdwg.mxu0
          %v1073 = vunpack.c.l.b16 %v994
          %v1074 = vunpack.c.h.b16 %v994
          %v1075 = vunpack.c.l.b16 %v995
          %v1076 = vunpack.c.h.b16 %v995
          %v1077 = vunpack.c.l.b16 %v996
          %v1078 = vunpack.c.h.b16 %v996
          %v1079 = vunpack.c.l.b16 %v997
          %v1080 = vunpack.c.h.b16 %v997
          %v1081 = vpack.c.b16 %v1075, %v1073
          %v1082 = vpack.c.b16 %v1076, %v1074
          %v1083 = vpack.c.b16 %v1079, %v1077
          %v1084 = vpack.c.b16 %v1080, %v1078
          %1089 = vmatprep.subr.bf16.mxu0 %v1082
          %1090 = vmatpush1.bf16.msra.mxu0 %v1081
          %1091 = vmatprep.subr.bf16.mxu0 %v1084
          %1092 = vmatpush1.bf16.msra.mxu0 %v1083
          %1093 = vmatprep.subr.bf16.mxu0 0
          %1094 = vmatpush1.bf16.msra.mxu0 0
          %1095 = vmatprep.subr.bf16.mxu0 0
          %1096 = vmatpush1.bf16.msra.mxu0 0
          %1097 = vmatprep.subr.bf16.mxu0 0
          %1098 = vmatpush1.bf16.msra.mxu0 0
          %1099 = vmatprep.subr.bf16.mxu0 0
          %1100 = vmatpush1.bf16.msra.mxu0 0
          %1101 = vmatprep.subr.bf16.mxu0 0
          %1102 = vmatpush1.bf16.msra.mxu0 0
          %1103 = vmatprep.subr.bf16.mxu0 0
          %1104 = vmatpush1.bf16.msra.mxu0 0
          %1105 = vmatprep.subr.bf16.mxu0 0
          %1106 = vmatpush1.bf16.msra.mxu0 0
          %1107 = vmatprep.subr.bf16.mxu0 0
          %1108 = vmatpush1.bf16.msra.mxu0 0
          %1109 = vmatprep.subr.bf16.mxu0 0
          %1110 = vmatpush1.bf16.msra.mxu0 0
          %1111 = vmatprep.subr.bf16.mxu0 0
          %1112 = vmatpush1.bf16.msra.mxu0 0
          %1113 = vmatprep.subr.bf16.mxu0 0
          %1114 = vmatpush1.bf16.msra.mxu0 0
          %1115 = vmatprep.subr.bf16.mxu0 0
          %1116 = vmatpush1.bf16.msra.mxu0 0
          %1117 = vmatprep.subr.bf16.mxu0 0
          %1118 = vmatpush1.bf16.msra.mxu0 0
          %1119 = vmatprep.subr.bf16.mxu0 0
          %1120 = vmatpush1.bf16.msra.mxu0 0
          %1121 = vmatprep.mubr.bf16.mxu0 0
          %1122 = vmatmul.mubr.bf16.gmra.mrb[0].mxu0 %v716
          %v1123 = vpop.f32.mrb[0].mxu0
          %v1124 = vadd.f32 %v1061, %v1123
          %v1125 = vpop.f32.mrb[0].mxu0
          %v1126 = vadd.f32 %v1063, %v1125
          %v1127 = vpop.f32.mrb[0].mxu0
          %v1128 = vadd.f32 %v1065, %v1127
          %v1129 = vpop.f32.mrb[0].mxu0
          %v1130 = vadd.f32 %v1067, %v1129
          %1131 = vdwg.mxu0
          %v1132 = vlaneseq
          %v1133 = vshrl.u32 %v1132, 7
          %v1134 = vsub.s32 5, %v1133
          %v1135 = vrot.slane %v791, %v1134
          %v1136 = vlaneseq
          %v1137 = vshrl.u32 %v1136, 7
          %v1138 = vsub.s32 5, %v1137
          %v1139 = vrot.slane %v792, %v1138
          %v1140 = vadd.f32 %v1124, %v1135
          %v1141 = vadd.f32 %v1126, %v1139
          %v1142 = vadd.f32 %v1128, %v1135
          %v1143 = vadd.f32 %v1130, %v1139
          %1144 = vst [vmem:[#allocation2] sm:$0xff] %v1140
          %1145 = vst [vmem:[#allocation2 + $0x8] sm:$0xff] %v1141
          %1146 = vst [vmem:[#allocation2 + $0x10] sm:$0xff] %v1142
          %1147 = vst [vmem:[#allocation2 + $0x18] sm:$0xff] %v1143
          %v1148 = vld [vmem:[#allocation3] sm:$0xff]
          %v1149 = vld [vmem:[#allocation3 + $0x8] sm:$0xff]
          %v1150 = vadd.f32 %v1148, %v991
          %v1151 = vadd.f32 %v1149, %v993
          %v1152 = vlaneseq
          %v1153 = vshrl.u32 %v1152, 7
          %v1154 = vsub.s32 0, %v1153
          %v1155 = vrot.slane %v680, %v1154
          %v1156 = vadd.f32 %v1150, %v1155
          %v1157 = vadd.f32 %v1151, %v1155
          %vm1158 = vcmask 7168
          %1159 = vst.msk [vmem:[#allocation3] sm:$0xff] %vm1158, %v1156
          %1160 = vst.msk [vmem:[#allocation3 + $0x8] sm:$0xff] %vm1158, %v1157
        $region40: #{inn_forward.1} parent=27 // pred_fallthru
          _
        %p1161 = scmp.eq.s32.totalorder %s19, 4
        // Predicated region
        $region41: #{inn_forward.1} parent=27 // pred_check
          %p1162 = pneg %p1161
        $region42: #{inn_forward.1} parent=27 // pred_check_branch
          %1164 = sbr.rel (%p1162) target = $region44
        $region43: #{inn_forward.1} parent=27 // pred_region
          %v1165 = vld [vmem:[#allocation2] sm:$0xff]
          %v1166 = vld [vmem:[#allocation2 + $0x10] sm:$0xff]
          %1167 = vst [vmem:[%s2] sm:$0xff] %v1165
          %1168 = vst [vmem:[%s2 + $0x8] sm:$0xff] %v1166
          %v1169 = vtanh.pop %v1165
          %v1170 = vtanh.pop %v1166
          %1171 = vst [vmem:[%s3] sm:$0xff] %v1169
          %1172 = vst [vmem:[%s3 + $0x8] sm:$0xff] %v1170
          %v1173 = vld [vmem:[#allocation3] sm:$0xff]
          %v1174 = vld [vmem:[#allocation3 + $0x8] sm:$0xff]
          %vm1175 = vcmask 7168
          %1176 = vst.msk [vmem:[%s4] sm:$0xff] %vm1175, %v1173
          %1177 = vst.msk [vmem:[%s4 + $0x8] sm:$0xff] %vm1175, %v1174
        $region44: #{inn_forward.1} parent=27 // pred_fallthru
          _
        // Predicated region
        $region45: #{inn_forward.1} parent=27 // pred_check
          %p1178 = pneg %p79
        $region46: #{inn_forward.1} parent=27 // pred_check_branch
          %1180 = sbr.rel (%p1178) target = $region48
        $region47: #{inn_forward.1} parent=27 // pred_region
          _
        $region48: #{inn_forward.1} parent=27 // pred_fallthru
          _
        // Predicated region
        $region49: #{inn_forward.1} parent=27 // pred_check
          %p1181 = pneg %p100
        $region50: #{inn_forward.1} parent=27 // pred_check_branch
          %1183 = sbr.rel (%p1181) target = $region52
        $region51: #{inn_forward.1} parent=27 // pred_region
          _
        $region52: #{inn_forward.1} parent=27 // pred_fallthru
          _
        // Predicated region
        $region53: #{inn_forward.1} parent=27 // pred_check
          %p1184 = pneg %p121
        $region54: #{inn_forward.1} parent=27 // pred_check_branch
          %1186 = sbr.rel (%p1184) target = $region56
        $region55: #{inn_forward.1} parent=27 // pred_region
          _
        $region56: #{inn_forward.1} parent=27 // pred_fallthru
          _
        // Predicated region
        $region57: #{inn_forward.1} parent=27 // pred_check
          %p1187 = pneg %p79
        $region58: #{inn_forward.1} parent=27 // pred_check_branch
          %1189 = sbr.rel (%p1187) target = $region60
        $region59: #{inn_forward.1} parent=27 // pred_region
          _
        $region60: #{inn_forward.1} parent=27 // pred_fallthru
          _
        // Predicated region
        $region61: #{inn_forward.1} parent=27 // pred_check
          %p1190 = pneg %p100
        $region62: #{inn_forward.1} parent=27 // pred_check_branch
          %1192 = sbr.rel (%p1190) target = $region64
        $region63: #{inn_forward.1} parent=27 // pred_region
          _
        $region64: #{inn_forward.1} parent=27 // pred_fallthru
          _
        // Predicated region
        $region65: #{inn_forward.1} parent=27 // pred_check
          %p1193 = pneg %p121
        $region66: #{inn_forward.1} parent=27 // pred_check_branch
          %1195 = sbr.rel (%p1193) target = $region68
        $region67: #{inn_forward.1} parent=27 // pred_region
          _
        $region68: #{inn_forward.1} parent=27 // pred_fallthru
          _
      $region28: #{inn_forward.1} parent=5 // pred_fallthru
        _
      %p1196 = scmp.le.s32.totalorder 2, %s14
      // Predicated region
      $region69: #{inn_forward.1} parent=5 // pred_check
        %p1197 = pneg %p1196
      $region70: #{inn_forward.1} parent=5 // pred_check_branch
        %1199 = sbr.rel (%p1197) target = $region72
      $region71: #{inn_forward.1} parent=5 // pred_region
        %s1200 = ssub.s32 %s14, 2
      $region72: #{inn_forward.1} parent=5 // pred_fallthru
        _
    $region6: #{inn_forward.1} parent=1 // loop_footer
      %s18 = sadd.s32 1, %s14
    $region7: #{inn_forward.1} parent=1 // loop_footer_branch
      %13 = sbr.rel target = $region3
    $region8: #{inn_forward.1} parent=1 // loop_exit
      _
    %1201 = vsyncpa [#allocation5], 1
    %s1202 = scalar_lea.sflag [#allocation5], 1
    %1203 = vsyncpa %s1202, 1

</llo_original>
